<compile_context>
chip_gen: v5e
topology: v5e:2x2
jax: 0.10.0
libtpu: 0.0.40
codegen_flags: <defaults>
</compile_context>

<pallas_src>
import numpy as np
import jax
import jax.numpy as jnp
from jax.experimental import pallas as pl
from jax.experimental.pallas import tpu as pltpu

N_QUBITS = 10
DIM = 1 << N_QUBITS          # 1024-dim statevector
TN = 256                     # output-column tile of the unitary matmul (4 grid steps)


# ----------------------------------------------------------------------------
# Host-side glue: build the StronglyEntanglingLayers unitary from the weights.
# (Parameter setup only -- does not depend on the input x.)
# TODO(synk): the weights->unitary construction itself has no Pallas equivalent;
#             it is done once on host in numpy, the kernel consumes the fixed U.
# ----------------------------------------------------------------------------
def _rot_matrix(phi, theta, omega):
    # PennyLane Rot(phi, theta, omega) = RZ(omega) @ RY(theta) @ RZ(phi)
    rz = lambda a: np.array([[np.exp(-0.5j * a), 0.0],
                             [0.0, np.exp(0.5j * a)]], dtype=complex)
    ry = lambda t: np.array([[np.cos(t / 2), -np.sin(t / 2)],
                             [np.sin(t / 2),  np.cos(t / 2)]], dtype=complex)
    return rz(omega) @ ry(theta) @ rz(phi)


def _apply_1q(states, gate, wire):
    states = np.moveaxis(states, wire, 0)
    shp = states.shape
    states = (gate @ states.reshape(2, -1)).reshape(shp)
    return np.moveaxis(states, 0, wire)


def _apply_cnot(states, control, target):
    states = np.moveaxis(states, (control, target), (0, 1))
    shp = states.shape
    cnot = np.array([[1, 0, 0, 0],
                     [0, 1, 0, 0],
                     [0, 0, 0, 1],
                     [0, 0, 1, 0]], dtype=complex)
    states = (cnot @ states.reshape(4, -1)).reshape(shp)
    return np.moveaxis(states, (0, 1), (control, target))


def strongly_entangling_unitary(weights, n_qubits):
    """Full (2^n x 2^n) unitary of qml.StronglyEntanglingLayers(weights)."""
    n_layers = weights.shape[0]
    dim = 1 << n_qubits
    states = np.eye(dim, dtype=complex).reshape((2,) * n_qubits + (dim,))
    for l in range(n_layers):
        for w in range(n_qubits):
            g = _rot_matrix(weights[l, w, 0], weights[l, w, 1], weights[l, w, 2])
            states = _apply_1q(states, g, w)
        r = (l % (n_qubits - 1)) + 1            # default CNOT ranges
        for w in range(n_qubits):
            states = _apply_cnot(states, w, (w + r) % n_qubits)
    return states.reshape(dim, dim)             # U[:, j] = circuit|j>


# ----------------------------------------------------------------------------
# Pallas kernel: pure stream-matmul-reduce over U^T column tiles.
#   phi_ref : (2*B, DIM) f32   stacked [phi_r ; phi_i], resident (constant index)
#   urt_ref : (DIM, TN) bf16   current column tile of U^T.real
#   uit_ref : (DIM, TN) bf16   current column tile of U^T.imag
#   out_ref : (B, 1)    f32    resident <Z_0> accumulator (logits, pre-sigmoid)
# ----------------------------------------------------------------------------
def fraud_kernel(phi_ref, urt_ref, uit_ref, out_ref):
    j = pl.program_id(0)
    B = out_ref.shape[0]
    tn = urt_ref.shape[1]

    @pl.when(j == 0)
    def _init():
        out_ref[...] = jnp.zeros_like(out_ref)

    # Complex matmul via 2 MXU dots on the stacked LHS.  Weight tiles are
    # streamed bf16 from HBM and upconverted here (accuracy; HBM bytes unchanged).
    phi = phi_ref[...]                                         # (2B, DIM) f32
    ur = urt_ref[...].astype(jnp.float32)                      # (DIM, tn)
    ui = uit_ref[...].astype(jnp.float32)
    s1 = jnp.dot(phi, ur, preferred_element_type=jnp.float32)  # (2B, tn)
    s2 = jnp.dot(phi, ui, preferred_element_type=jnp.float32)
    psi_r = s1[:B, :] - s2[B:, :]
    psi_i = s2[:B, :] + s1[B:, :]
    prob = psi_r * psi_r + psi_i * psi_i                       # (B, tn)

    # <Z_0> partial sum: whole tile lies in one half (TN divides DIM/2), so the
    # PauliZ eigenvalue is a single scalar per tile.
    col0 = j * tn
    sign = jnp.where(col0 < (DIM // 2), 1.0, -1.0)
    out_ref[...] += sign * jnp.sum(prob, axis=1, keepdims=True)


def quantum_fraud_detector_forward(x, u_real_t, u_imag_t, tn=TN):
    """x: (B, N_QUBITS) f32; u_*_t: (DIM, DIM) real/imag of U^T (any float dtype)."""
    B, nq = x.shape
    assert nq == N_QUBITS
    assert DIM % tn == 0 and (DIM // 2) % tn == 0

    # Pad batch to a multiple of 8 so the stacked [phi_r; phi_i] halves are
    # sublane-tile aligned.  (Kernel is HBM-bound on the U stream, so stacking
    # many requests per call -- up to ~128-256 rows -- is essentially free.)
    B_pad = max(8, ((B + 7) // 8) * 8)
    if B_pad != B:
        x = jnp.pad(x, ((0, B_pad - B), (0, 0)))   # padded rows -> |0...0> state

    # --- Angle embedding RX(x_q) on each wire, done in the JAX wrapper (XLA) ---
    # amplitude(index) = (-i)^popcount(index) * prod_q (bit_q ? sin(x_q/2) : cos(x_q/2))
    cth = jnp.cos(x * 0.5)
    sth = jnp.sin(x * 0.5)
    idx = jnp.arange(DIM, dtype=jnp.int32)[None, :]            # (1, DIM)
    mag = jnp.ones((B_pad, DIM), jnp.float32)
    pop = jnp.zeros((1, DIM), jnp.int32)
    for q in range(N_QUBITS):                                  # wire q = bit (N-1-q)
        bit = jax.lax.shift_right_logical(idx, N_QUBITS - 1 - q) & 1
        mag = mag * jnp.where(bit == 1, sth[:, q:q + 1], cth[:, q:q + 1])
        pop = pop + bit
    k = pop & 3
    ph_r = jnp.where(k == 0, 1.0, jnp.where(k == 2, -1.0, 0.0))
    ph_i = jnp.where(k == 1, -1.0, jnp.where(k == 3, 1.0, 0.0))
    phi = jnp.concatenate([mag * ph_r, mag * ph_i], axis=0).astype(jnp.float32)

    urt = u_real_t.astype(jnp.bfloat16)
    uit = u_imag_t.astype(jnp.bfloat16)

    grid = (DIM // tn,)
    z = pl.pallas_call(
        fraud_kernel,
        out_shape=jax.ShapeDtypeStruct((B_pad, 1), jnp.float32),
        grid_spec=pltpu.PrefetchScalarGridSpec(
            num_scalar_prefetch=0,
            grid=grid,
            in_specs=[
                pl.BlockSpec((2 * B_pad, DIM), lambda j: (0, 0)),  # stacked Phi
                pl.BlockSpec((DIM, tn), lambda j: (0, j)),         # U^T.real tile
                pl.BlockSpec((DIM, tn), lambda j: (0, j)),         # U^T.imag tile
            ],
            out_specs=pl.BlockSpec((B_pad, 1), lambda j: (0, 0)),  # resident acc
        ),
        compiler_params=pltpu.CompilerParams(
            dimension_semantics=("arbitrary",),
            vmem_limit_bytes=16 << 20,
        ),
    )(phi, urt, uit)

    return jax.nn.sigmoid(z[:B, 0])


# ----------------------------------------------------------------------------
if __name__ == "__main__":
    N_LAYERS = 2
    BATCH = 4

    key = jax.random.PRNGKey(0)
    kx, kw = jax.random.split(key)
    x = jax.random.uniform(kx, (BATCH, N_QUBITS), jnp.float32, 0.0, float(np.pi))
    weights = np.asarray(
        jax.random.uniform(kw, (N_LAYERS, N_QUBITS, 3), jnp.float32,
                           0.0, float(2 * np.pi)),
        dtype=np.float64)

    # Fixed circuit unitary (parameter setup, input-independent).
    U = strongly_entangling_unitary(weights, N_QUBITS)     # complex128 (1024,1024)
    u_t = U.T
    urt = jnp.asarray(np.asarray(u_t.real, np.float32))
    uit = jnp.asarray(np.asarray(u_t.imag, np.float32))

    out = quantum_fraud_detector_forward(x, urt, uit)
    out = jax.block_until_ready(out)

    # numpy reference (float64) of the same semantics
    xn = np.asarray(x, np.float64)
    c, s = np.cos(xn / 2), np.sin(xn / 2)
    idx = np.arange(DIM)
    phi = np.ones((BATCH, DIM), dtype=complex)
    for q in range(N_QUBITS):
        bit = (idx >> (N_QUBITS - 1 - q)) & 1
        phi *= np.where(bit == 1, (-1j) * s[:, q:q + 1], c[:, q:q + 1])
    psi = phi @ U.T
    z = np.sum((np.abs(psi) ** 2) * np.where(idx < DIM // 2, 1.0, -1.0), axis=1)
    ref = 1.0 / (1.0 + np.exp(-z))

    assert out.shape == (BATCH,)
    assert np.allclose(np.asarray(out), ref, atol=2e-2), (np.asarray(out), ref)
    print("KERNEL_OK")
</pallas_src>

<mosaic_0001>
module attributes {stable_mosaic.version = 11 : i64} {
  func.func @fraud_kernel(%arg0: i32, %arg1: memref<16x1024xf32, #tpu.memory_space<vmem>>, %arg2: memref<1024x256xbf16, #tpu.memory_space<vmem>>, %arg3: memref<1024x256xbf16, #tpu.memory_space<vmem>>, %arg4: memref<8x1xf32, #tpu.memory_space<vmem>>) attributes {dimension_semantics = [#tpu.dimension_semantics<arbitrary>], iteration_bounds = array<i64: 4>, scalar_prefetch = 0 : i64, scratch_operands = 0 : i64, tpu.core_type = #tpu.core_type<tc>, window_params = [{pipeline_mode = #tpu.pipeline_mode<synchronous>, transform_indices = @transform_0, window_bounds = array<i64: 16, 1024>}, {transform_indices = @transform_1, window_bounds = array<i64: 1024, 256>}, {transform_indices = @transform_2, window_bounds = array<i64: 1024, 256>}, {pipeline_mode = #tpu.pipeline_mode<synchronous>, transform_indices = @transform_3, window_bounds = array<i64: 8, 1>}]} {
    %c0_i32 = arith.constant 0 : i32
    %0 = arith.cmpi eq, %arg0, %c0_i32 : i32
    %1 = arith.extui %0 : i1 to i32
    %c0_i32_0 = arith.constant 0 : i32
    %2 = arith.cmpi ne, %1, %c0_i32_0 : i32
    scf.if %2 {
      %cst_14 = arith.constant 0.000000e+00 : f32
      %29 = vector.broadcast %cst_14 : f32 to vector<8x1xf32>
      %c0_15 = arith.constant 0 : index
      %c0_16 = arith.constant 0 : index
      %30 = vector.load %arg4[%c0_15, %c0_16] : memref<8x1xf32, #tpu.memory_space<vmem>>, vector<8x1xf32>
      tpu.vector_store %arg4[%c0_15, %c0_16], %29 {strides = array<i32>} : memref<8x1xf32, #tpu.memory_space<vmem>>, vector<8x1xf32>,
    } else {
    }
    %c0 = arith.constant 0 : index
    %c0_1 = arith.constant 0 : index
    %3 = vector.load %arg1[%c0, %c0_1] : memref<16x1024xf32, #tpu.memory_space<vmem>>, vector<16x1024xf32>
    %c0_2 = arith.constant 0 : index
    %c0_3 = arith.constant 0 : index
    %4 = vector.load %arg2[%c0_2, %c0_3] : memref<1024x256xbf16, #tpu.memory_space<vmem>>, vector<1024x256xbf16>
    %5 = arith.extf %4 : vector<1024x256xbf16> to vector<1024x256xf32>
    %c0_4 = arith.constant 0 : index
    %c0_5 = arith.constant 0 : index
    %6 = vector.load %arg3[%c0_4, %c0_5] : memref<1024x256xbf16, #tpu.memory_space<vmem>>, vector<1024x256xbf16>
    %7 = arith.extf %6 : vector<1024x256xbf16> to vector<1024x256xf32>
    %cst = arith.constant dense<0.000000e+00> : vector<16x256xf32>
    %8 = tpu.matmul %3, %5, %cst {dimension_numbers = #tpu.dot_dimension_numbers<[1], [0], [0], [1], [0, 0, 1, 1], [], []>} : vector<16x1024xf32>, vector<1024x256xf32>, vector<16x256xf32> -> vector<16x256xf32>
    %cst_6 = arith.constant dense<0.000000e+00> : vector<16x256xf32>
    %9 = tpu.matmul %3, %7, %cst_6 {dimension_numbers = #tpu.dot_dimension_numbers<[1], [0], [0], [1], [0, 0, 1, 1], [], []>} : vector<16x1024xf32>, vector<1024x256xf32>, vector<16x256xf32> -> vector<16x256xf32>
    %10 = vector.extract_strided_slice %8 {offsets = [0, 0], sizes = [8, 256], strides = [1, 1]} : vector<16x256xf32> to vector<8x256xf32>
    %11 = vector.extract_strided_slice %9 {offsets = [8, 0], sizes = [8, 256], strides = [1, 1]} : vector<16x256xf32> to vector<8x256xf32>
    %12 = arith.subf %10, %11 : vector<8x256xf32>
    %13 = vector.extract_strided_slice %9 {offsets = [0, 0], sizes = [8, 256], strides = [1, 1]} : vector<16x256xf32> to vector<8x256xf32>
    %14 = vector.extract_strided_slice %8 {offsets = [8, 0], sizes = [8, 256], strides = [1, 1]} : vector<16x256xf32> to vector<8x256xf32>
    %15 = arith.addf %13, %14 : vector<8x256xf32>
    %16 = arith.mulf %12, %12 : vector<8x256xf32>
    %17 = arith.mulf %15, %15 : vector<8x256xf32>
    %18 = arith.addf %16, %17 : vector<8x256xf32>
    %c256_i32 = arith.constant 256 : i32
    %19 = arith.muli %arg0, %c256_i32 : i32
    %c512_i32 = arith.constant 512 : i32
    %20 = arith.cmpi slt, %19, %c512_i32 : i32
    %cst_7 = arith.constant 1.000000e+00 : f32
    %cst_8 = arith.constant -1.000000e+00 : f32
    %21 = arith.select %20, %cst_7, %cst_8 : f32
    %c0_9 = arith.constant 0 : index
    %c0_10 = arith.constant 0 : index
    %22 = vector.load %arg4[%c0_9, %c0_10] : memref<8x1xf32, #tpu.memory_space<vmem>>, vector<8x1xf32>
    %cst_11 = arith.constant dense<0.000000e+00> : vector<8xf32>
    %23 = vector.multi_reduction <add>, %18, %cst_11 [1] : vector<8x256xf32> to vector<8xf32>
    %24 = vector.shape_cast %23 : vector<8xf32> to vector<8x1xf32>
    %25 = vector.broadcast %21 : f32 to vector<8x1xf32>
    %26 = arith.mulf %25, %24 : vector<8x1xf32>
    %27 = arith.addf %22, %26 : vector<8x1xf32>
    %c0_12 = arith.constant 0 : index
    %c0_13 = arith.constant 0 : index
    %28 = vector.load %arg4[%c0_12, %c0_13] : memref<8x1xf32, #tpu.memory_space<vmem>>, vector<8x1xf32>
    tpu.vector_store %arg4[%c0_12, %c0_13], %27 {strides = array<i32>} : memref<8x1xf32, #tpu.memory_space<vmem>>, vector<8x1xf32>,
    return
  }
  func.func @transform_0(%arg0: i32) -> (i32, i32) {
    %c0_i32 = arith.constant 0 : i32
    %c0_i32_0 = arith.constant 0 : i32
    %c0_i32_1 = arith.constant 0 : i32
    return %c0_i32, %c0_i32_0 : i32, i32
  }
  func.func @transform_1(%arg0: i32) -> (i32, i32) {
    %c0_i32 = arith.constant 0 : i32
    %c0_i32_0 = arith.constant 0 : i32
    return %c0_i32, %arg0 : i32, i32
  }
  func.func @transform_2(%arg0: i32) -> (i32, i32) {
    %c0_i32 = arith.constant 0 : i32
    %c0_i32_0 = arith.constant 0 : i32
    return %c0_i32, %arg0 : i32, i32
  }
  func.func @transform_3(%arg0: i32) -> (i32, i32) {
    %c0_i32 = arith.constant 0 : i32
    %c0_i32_0 = arith.constant 0 : i32
    %c0_i32_1 = arith.constant 0 : i32
    return %c0_i32, %c0_i32_0 : i32, i32
  }
}

</mosaic_0001>

<llo_original>
// kernel: tpu_custom_call.1
$region0: #{tpu_custom_call.1}
  #allocation0 [shape = 'u32[]', space=smem, size = 0x4, offset = 0x4, fixed_abs, tag = 'smem constant byte address 0x4 - core index']
  #allocation1 [shape = 'u32[72,128]{1,0:T(1,128)}', space=vmem, size = 0x9000, scoped, tag = 'internal scratch']
  %s0 = inlined_call_operand.hbm [shape: f32[16,1024], index: 0, kind: input, shape index: {}]
  %s1 = inlined_call_operand.hbm [shape: bf16[1024,1024], index: 1, kind: input, shape index: {}]
  %s2 = inlined_call_operand.hbm [shape: bf16[1024,1024], index: 2, kind: input, shape index: {}]
  %s3 = inlined_call_operand.vmem [shape: f32[8,1], index: 3, kind: output, shape index: {}]
  %s4 = sld [smem:[#allocation0]]
  $region61: #{tpu_custom_call.1} parent=0
    _
  %s6 = ssub.s32 1, %s4
  %s7 = scalar_select 0, %s6, %s4
  $region1: #{tpu_custom_call.1} parent=0
    #allocation2 [shape = 'u8[65536]{0}', space=vmem, size = 0x10000, scoped, tag = 'input window, operand 0, single buffered']
    #allocation3 [shape = 's32[2]{0}', space=sflag, size = 0x8, scoped, tag = 'scoped memory for tpu_custom_call.1']
    #allocation4 [shape = 'u8[1048576]{0}', space=vmem, size = 0x100000, scoped, tag = 'input window, operand 1']
    #allocation5 [shape = 's32[2]{0}', space=sflag, size = 0x8, scoped, tag = 'scoped memory for tpu_custom_call.1']
    #allocation6 [shape = 'u8[1048576]{0}', space=vmem, size = 0x100000, scoped, tag = 'input window, operand 2']
    %8 = vsyncpa [#allocation3], 0
    %9 = vsyncpa [#allocation5], 0
    %s10 = scalar_lea.sflag [#allocation5], 1
    %11 = vsyncpa %s10, 0
    loop: start=0, step=1, limit=6
    $region2: #{tpu_custom_call.1} parent=1 // loop_pre_header
      _
    $region3: #{tpu_custom_call.1} parent=1 // loop_header
      %s13 = sphi 0, %s17
      %p14 = scmp.ge.s32.totalorder %s13, 6
      %s21 = sphi 0, %s21
      %s23 = sphi 0, %s21
      %s24 = sphi 0, %s23
      %s38 = sphi 0, %s24
      %s44 = sphi 0, %s46
      %s47 = sphi 0, %s44
      %s48 = sphi 0, %s47
      %s64 = sphi 0, %s48
      %s70 = sphi 0, %s72
      %s73 = sphi 0, %s70
      %s74 = sphi 0, %s73
      %s90 = sphi 0, %s74
      %s94 = sphi 0, %s94
      %s96 = sphi 0, %s94
      %s97 = sphi 0, %s96
      %s111 = sphi 0, %s97
    $region4: #{tpu_custom_call.1} parent=1 // loop_header_branch
      %16 = sbr.rel (%p14) target = $region8
    $region5: #{tpu_custom_call.1} parent=1 // loop_body
      %s18 = ssub.s32 %s13, 1
      %s19 = ssub.s32 %s13, 2
      %s20 = sadd.s32 %s13, 1
      %s22 = sadd.s32 %s21, 1
      %p25 = scmp.eq.s32.totalorder %s13, 3
      %p26 = scmp.ne.s32.totalorder %s21, %s23
      %p27 = scmp.eq.s32.totalorder %s13, 0
      %p28 = por %p26, %p27
      %p29 = scmp.ne.s32.totalorder %s21, %s23
      %p30 = scmp.eq.s32.totalorder %s18, 3
      %p31 = por %p29, %p30
      %p32 = scmp.ne.s32.totalorder %s23, %s24
      %p33 = scmp.eq.s32.totalorder %s18, 0
      %p34 = por %p32, %p33
      %p35 = scmp.ne.s32.totalorder %s23, %s24
      %p36 = scmp.eq.s32.totalorder %s19, 3
      %p37 = por %p35, %p36
      %p39 = scmp.ne.s32.totalorder %s24, %s38
      %p40 = scmp.eq.s32.totalorder %s19, 0
      %p41 = por %p39, %p40
      %s42 = ssub.s32 %s13, %s20
      %p43 = scmp.eq.s32.totalorder %s42, 0
      %s45 = sadd.s32 %s44, 1
      %s46 = scalar_select %p43, %s44, %s45
      %p49 = pneg %p43
      %p50 = scmp.eq.s32.totalorder %s13, 3
      %p51 = por %p49, %p50
      %p52 = scmp.ne.s32.totalorder %s44, %s47
      %p53 = scmp.eq.s32.totalorder %s13, 0
      %p54 = por %p52, %p53
      %p55 = scmp.ne.s32.totalorder %s44, %s47
      %p56 = scmp.eq.s32.totalorder %s18, 3
      %p57 = por %p55, %p56
      %p58 = scmp.ne.s32.totalorder %s47, %s48
      %p59 = scmp.eq.s32.totalorder %s18, 0
      %p60 = por %p58, %p59
      %p61 = scmp.ne.s32.totalorder %s47, %s48
      %p62 = scmp.eq.s32.totalorder %s19, 3
      %p63 = por %p61, %p62
      %p65 = scmp.ne.s32.totalorder %s48, %s64
      %p66 = scmp.eq.s32.totalorder %s19, 0
      %p67 = por %p65, %p66
      %s68 = ssub.s32 %s13, %s20
      %p69 = scmp.eq.s32.totalorder %s68, 0
      %s71 = sadd.s32 %s70, 1
      %s72 = scalar_select %p69, %s70, %s71
      %p75 = pneg %p69
      %p76 = scmp.eq.s32.totalorder %s13, 3
      %p77 = por %p75, %p76
      %p78 = scmp.ne.s32.totalorder %s70, %s73
      %p79 = scmp.eq.s32.totalorder %s13, 0
      %p80 = por %p78, %p79
      %p81 = scmp.ne.s32.totalorder %s70, %s73
      %p82 = scmp.eq.s32.totalorder %s18, 3
      %p83 = por %p81, %p82
      %p84 = scmp.ne.s32.totalorder %s73, %s74
      %p85 = scmp.eq.s32.totalorder %s18, 0
      %p86 = por %p84, %p85
      %p87 = scmp.ne.s32.totalorder %s73, %s74
      %p88 = scmp.eq.s32.totalorder %s19, 3
      %p89 = por %p87, %p88
      %p91 = scmp.ne.s32.totalorder %s74, %s90
      %p92 = scmp.eq.s32.totalorder %s19, 0
      %p93 = por %p91, %p92
      %s95 = sadd.s32 %s94, 1
      %p98 = scmp.eq.s32.totalorder %s13, 3
      %p99 = scmp.ne.s32.totalorder %s94, %s96
      %p100 = scmp.eq.s32.totalorder %s13, 0
      %p101 = por %p99, %p100
      %p102 = scmp.ne.s32.totalorder %s94, %s96
      %p103 = scmp.eq.s32.totalorder %s18, 3
      %p104 = por %p102, %p103
      %p105 = scmp.ne.s32.totalorder %s96, %s97
      %p106 = scmp.eq.s32.totalorder %s18, 0
      %p107 = por %p105, %p106
      %p108 = scmp.ne.s32.totalorder %s96, %s97
      %p109 = scmp.eq.s32.totalorder %s19, 3
      %p110 = por %p108, %p109
      %p112 = scmp.ne.s32.totalorder %s97, %s111
      %p113 = scmp.eq.s32.totalorder %s19, 0
      %p114 = por %p112, %p113
      %p115 = scmp.le.s32.totalorder 1, %s13
      %p116 = scmp.lt.s32.totalorder %s13, 5
      %p117 = pnand %p115, %p116
      %p118 = pneg %p117
      // Predicated region
      $region9: #{tpu_custom_call.1} parent=5 // pred_check
        _
      $region10: #{tpu_custom_call.1} parent=5 // pred_check_branch
        %120 = sbr.rel (%p117) target = $region12
      $region11: #{tpu_custom_call.1} parent=5 // pred_region
        %s121 = ssub.s32 %s13, 1
        // Predicated region
        $region13: #{tpu_custom_call.1} parent=11 // pred_check
          %p122 = pneg %p34
        $region14: #{tpu_custom_call.1} parent=11 // pred_check_branch
          %124 = sbr.rel (%p122) target = $region16
        $region15: #{tpu_custom_call.1} parent=11 // pred_region
          %126 = vsyncadd [#allocation3], 0
          %s127 = sshll.u32 %s0, 4
          %s128 = int_to_ptr.hbm [resolvable:$true] %s127
          %s129 = sshll.u32 [#allocation2], 4
          %s130 = int_to_ptr.vmem [resolvable:$true] %s129
          %135 = dma.hbm_to_vmem [thread:$0]  %s128, 2048, %s130, [#allocation3], 1024, 1024, 64
        $region16: #{tpu_custom_call.1} parent=11 // pred_fallthru
          _
      $region12: #{tpu_custom_call.1} parent=5 // pred_fallthru
        _
      %p136 = scmp.lt.s32.totalorder %s13, 4
      // Predicated region
      $region17: #{tpu_custom_call.1} parent=5 // pred_check
        %p137 = pneg %p136
      $region18: #{tpu_custom_call.1} parent=5 // pred_check_branch
        %139 = sbr.rel (%p137) target = $region20
      $region19: #{tpu_custom_call.1} parent=5 // pred_region
        // Predicated region
        $region21: #{tpu_custom_call.1} parent=19 // pred_check
          %p140 = pneg %p54
        $region22: #{tpu_custom_call.1} parent=19 // pred_check_branch
          %142 = sbr.rel (%p140) target = $region24
        $region23: #{tpu_custom_call.1} parent=19 // pred_region
          %s143 = sand.u32 %s13, 1
          %s144 = scalar_lea.sflag [#allocation5], %s143
          %s145 = sand.u32 %s44, 1
          %s146 = smul.addr %s145, 1024
          %s147 = scalar_lea.vmem [#allocation4], %s146
          %s148 = smul.u32 2, %s13
          %150 = vsyncadd %s144, 0
          %s151 = smul.addr %s148, 4
          %s152 = scalar_lea.hbm %s1, %s151
          %s153 = sshll.u32 %s152, 4
          %s154 = int_to_ptr.hbm [resolvable:$true] %s153
          %s155 = sshll.u32 %s147, 4
          %s156 = int_to_ptr.vmem [resolvable:$true] %s155
          %161 = dma.hbm_to_vmem [thread:$0]  %s154, 16384, %s156, %s144, 512, 128, 8
        $region24: #{tpu_custom_call.1} parent=19 // pred_fallthru
          _
        // Predicated region
        $region25: #{tpu_custom_call.1} parent=19 // pred_check
          %p162 = pneg %p80
        $region26: #{tpu_custom_call.1} parent=19 // pred_check_branch
          %164 = sbr.rel (%p162) target = $region28
        $region27: #{tpu_custom_call.1} parent=19 // pred_region
          %s165 = sand.u32 %s13, 1
          %s166 = scalar_lea.sflag [#allocation5], %s165
          %s167 = sand.u32 %s70, 1
          %s168 = smul.addr %s167, 1024
          %s169 = scalar_lea.vmem [#allocation6], %s168
          %s170 = smul.u32 2, %s13
          %172 = vsyncadd %s166, 0
          %s173 = smul.addr %s170, 4
          %s174 = scalar_lea.hbm %s2, %s173
          %s175 = sshll.u32 %s174, 4
          %s176 = int_to_ptr.hbm [resolvable:$true] %s175
          %s177 = sshll.u32 %s169, 4
          %s178 = int_to_ptr.vmem [resolvable:$true] %s177
          %183 = dma.hbm_to_vmem [thread:$0]  %s176, 16384, %s178, %s166, 512, 128, 8
        $region28: #{tpu_custom_call.1} parent=19 // pred_fallthru
          _
      $region20: #{tpu_custom_call.1} parent=5 // pred_fallthru
        _
      %p184 = scmp.le.s32.totalorder 1, %s13
      %p185 = scmp.lt.s32.totalorder %s13, 5
      %p186 = pnand %p184, %p185
      %p187 = pneg %p186
      // Predicated region
      $region29: #{tpu_custom_call.1} parent=5 // pred_check
        _
      $region30: #{tpu_custom_call.1} parent=5 // pred_check_branch
        %189 = sbr.rel (%p186) target = $region32
      $region31: #{tpu_custom_call.1} parent=5 // pred_region
        %s190 = ssub.s32 %s13, 1
        // Predicated region
        $region33: #{tpu_custom_call.1} parent=31 // pred_check
          %p191 = pneg %p34
        $region34: #{tpu_custom_call.1} parent=31 // pred_check_branch
          %193 = sbr.rel (%p191) target = $region36
        $region35: #{tpu_custom_call.1} parent=31 // pred_region
          %195 = dma.done [#allocation3], 2048
        $region36: #{tpu_custom_call.1} parent=31 // pred_fallthru
          _
        %s196 = sand.u32 %s18, 1
        %s197 = scalar_lea.sflag [#allocation5], %s196
        %s198 = sand.u32 %s47, 1
        %s199 = smul.addr %s198, 1024
        %s200 = scalar_lea.vmem [#allocation4], %s199
        // Predicated region
        $region37: #{tpu_custom_call.1} parent=31 // pred_check
          %p201 = pneg %p60
        $region38: #{tpu_custom_call.1} parent=31 // pred_check_branch
          %203 = sbr.rel (%p201) target = $region40
        $region39: #{tpu_custom_call.1} parent=31 // pred_region
          %205 = dma.done %s197, 16384
        $region40: #{tpu_custom_call.1} parent=31 // pred_fallthru
          _
        %s206 = sand.u32 %s18, 1
        %s207 = scalar_lea.sflag [#allocation5], %s206
        %s208 = sand.u32 %s73, 1
        %s209 = smul.addr %s208, 1024
        %s210 = scalar_lea.vmem [#allocation6], %s209
        // Predicated region
        $region41: #{tpu_custom_call.1} parent=31 // pred_check
          %p211 = pneg %p86
        $region42: #{tpu_custom_call.1} parent=31 // pred_check_branch
          %213 = sbr.rel (%p211) target = $region44
        $region43: #{tpu_custom_call.1} parent=31 // pred_region
          %215 = dma.done %s207, 16384
        $region44: #{tpu_custom_call.1} parent=31 // pred_fallthru
          _
        %p216 = pneg %p34
        %p217 = pneg %p31
        %s218 = sand.u32 %s18, 1
        %s219 = scalar_lea.sflag [#allocation5], %s218
        %s220 = sand.u32 %s47, 1
        %s221 = smul.addr %s220, 1024
        %s222 = scalar_lea.vmem [#allocation4], %s221
        %p223 = pneg %p60
        %p224 = pneg %p57
        %s225 = sand.u32 %s18, 1
        %s226 = scalar_lea.sflag [#allocation5], %s225
        %s227 = sand.u32 %s73, 1
        %s228 = smul.addr %s227, 1024
        %s229 = scalar_lea.vmem [#allocation6], %s228
        %p230 = pneg %p86
        %p231 = pneg %p83
        %p232 = pneg %p107
        %p233 = pneg %p104
        %s234 = smul.u32 2, %s18
        %s235 = smul.u32 2, %s18
        %p236 = scmp.eq.s32.totalorder %s18, 0
        // Predicated region
        $region45: #{tpu_custom_call.1} parent=31 // pred_check
          %p237 = pneg %p236
        $region46: #{tpu_custom_call.1} parent=31 // pred_check_branch
          %239 = sbr.rel (%p237) target = $region48
        $region47: #{tpu_custom_call.1} parent=31 // pred_region
          %vm240 = vcmask 7168
          %241 = vst.msk [vmem:[%s3] sm:$0xff] %vm240, 0.0
        $region48: #{tpu_custom_call.1} parent=31 // pred_fallthru
          _
        %v242 = vld [vmem:[#allocation2] sm:$0xff]
        %v243 = vld [vmem:[#allocation2 + $0x8] sm:$0xff]
        %v244 = vld [vmem:[#allocation2 + $0x10] sm:$0xff]
        %v245 = vld [vmem:[#allocation2 + $0x18] sm:$0xff]
        %v246 = vld [vmem:[#allocation2 + $0x20] sm:$0xff]
        %v247 = vld [vmem:[#allocation2 + $0x28] sm:$0xff]
        %v248 = vld [vmem:[#allocation2 + $0x30] sm:$0xff]
        %v249 = vld [vmem:[#allocation2 + $0x38] sm:$0xff]
        %v250 = vld [vmem:[#allocation2 + $0x40] sm:$0xff]
        %v251 = vld [vmem:[#allocation2 + $0x48] sm:$0xff]
        %v252 = vld [vmem:[#allocation2 + $0x50] sm:$0xff]
        %v253 = vld [vmem:[#allocation2 + $0x58] sm:$0xff]
        %v254 = vld [vmem:[#allocation2 + $0x60] sm:$0xff]
        %v255 = vld [vmem:[#allocation2 + $0x68] sm:$0xff]
        %v256 = vld [vmem:[#allocation2 + $0x70] sm:$0xff]
        %v257 = vld [vmem:[#allocation2 + $0x78] sm:$0xff]
        %v258 = vld [vmem:[%s200] sm:$0xff]
        %v259 = vld [vmem:[%s200 + $0x8] sm:$0xff]
        %v260 = vld [vmem:[%s200 + $0x10] sm:$0xff]
        %v261 = vld [vmem:[%s200 + $0x18] sm:$0xff]
        %v262 = vld [vmem:[%s200 + $0x20] sm:$0xff]
        %v263 = vld [vmem:[%s200 + $0x28] sm:$0xff]
        %v264 = vld [vmem:[%s200 + $0x30] sm:$0xff]
        %v265 = vld [vmem:[%s200 + $0x38] sm:$0xff]
        %v266 = vld [vmem:[%s200 + $0x40] sm:$0xff]
        %v267 = vld [vmem:[%s200 + $0x48] sm:$0xff]
        %v268 = vld [vmem:[%s200 + $0x50] sm:$0xff]
        %v269 = vld [vmem:[%s200 + $0x58] sm:$0xff]
        %v270 = vld [vmem:[%s200 + $0x60] sm:$0xff]
        %v271 = vld [vmem:[%s200 + $0x68] sm:$0xff]
        %v272 = vld [vmem:[%s200 + $0x70] sm:$0xff]
        %v273 = vld [vmem:[%s200 + $0x78] sm:$0xff]
        %v274 = vld [vmem:[%s200 + $0x80] sm:$0xff]
        %v275 = vld [vmem:[%s200 + $0x88] sm:$0xff]
        %v276 = vld [vmem:[%s200 + $0x90] sm:$0xff]
        %v277 = vld [vmem:[%s200 + $0x98] sm:$0xff]
        %v278 = vld [vmem:[%s200 + $0xa0] sm:$0xff]
        %v279 = vld [vmem:[%s200 + $0xa8] sm:$0xff]
        %v280 = vld [vmem:[%s200 + $0xb0] sm:$0xff]
        %v281 = vld [vmem:[%s200 + $0xb8] sm:$0xff]
        %v282 = vld [vmem:[%s200 + $0xc0] sm:$0xff]
        %v283 = vld [vmem:[%s200 + $0xc8] sm:$0xff]
        %v284 = vld [vmem:[%s200 + $0xd0] sm:$0xff]
        %v285 = vld [vmem:[%s200 + $0xd8] sm:$0xff]
        %v286 = vld [vmem:[%s200 + $0xe0] sm:$0xff]
        %v287 = vld [vmem:[%s200 + $0xe8] sm:$0xff]
        %v288 = vld [vmem:[%s200 + $0xf0] sm:$0xff]
        %v289 = vld [vmem:[%s200 + $0xf8] sm:$0xff]
        %v290 = vld [vmem:[%s200 + $0x100] sm:$0xff]
        %v291 = vld [vmem:[%s200 + $0x108] sm:$0xff]
        %v292 = vld [vmem:[%s200 + $0x110] sm:$0xff]
        %v293 = vld [vmem:[%s200 + $0x118] sm:$0xff]
        %v294 = vld [vmem:[%s200 + $0x120] sm:$0xff]
        %v295 = vld [vmem:[%s200 + $0x128] sm:$0xff]
        %v296 = vld [vmem:[%s200 + $0x130] sm:$0xff]
        %v297 = vld [vmem:[%s200 + $0x138] sm:$0xff]
        %v298 = vld [vmem:[%s200 + $0x140] sm:$0xff]
        %v299 = vld [vmem:[%s200 + $0x148] sm:$0xff]
        %v300 = vld [vmem:[%s200 + $0x150] sm:$0xff]
        %v301 = vld [vmem:[%s200 + $0x158] sm:$0xff]
        %v302 = vld [vmem:[%s200 + $0x160] sm:$0xff]
        %v303 = vld [vmem:[%s200 + $0x168] sm:$0xff]
        %v304 = vld [vmem:[%s200 + $0x170] sm:$0xff]
        %v305 = vld [vmem:[%s200 + $0x178] sm:$0xff]
        %v306 = vld [vmem:[%s200 + $0x180] sm:$0xff]
        %v307 = vld [vmem:[%s200 + $0x188] sm:$0xff]
        %v308 = vld [vmem:[%s200 + $0x190] sm:$0xff]
        %v309 = vld [vmem:[%s200 + $0x198] sm:$0xff]
        %v310 = vld [vmem:[%s200 + $0x1a0] sm:$0xff]
        %v311 = vld [vmem:[%s200 + $0x1a8] sm:$0xff]
        %v312 = vld [vmem:[%s200 + $0x1b0] sm:$0xff]
        %v313 = vld [vmem:[%s200 + $0x1b8] sm:$0xff]
        %v314 = vld [vmem:[%s200 + $0x1c0] sm:$0xff]
        %v315 = vld [vmem:[%s200 + $0x1c8] sm:$0xff]
        %v316 = vld [vmem:[%s200 + $0x1d0] sm:$0xff]
        %v317 = vld [vmem:[%s200 + $0x1d8] sm:$0xff]
        %v318 = vld [vmem:[%s200 + $0x1e0] sm:$0xff]
        %v319 = vld [vmem:[%s200 + $0x1e8] sm:$0xff]
        %v320 = vld [vmem:[%s200 + $0x1f0] sm:$0xff]
        %v321 = vld [vmem:[%s200 + $0x1f8] sm:$0xff]
        %v322 = vld [vmem:[%s200 + $0x200] sm:$0xff]
        %v323 = vld [vmem:[%s200 + $0x208] sm:$0xff]
        %v324 = vld [vmem:[%s200 + $0x210] sm:$0xff]
        %v325 = vld [vmem:[%s200 + $0x218] sm:$0xff]
        %v326 = vld [vmem:[%s200 + $0x220] sm:$0xff]
        %v327 = vld [vmem:[%s200 + $0x228] sm:$0xff]
        %v328 = vld [vmem:[%s200 + $0x230] sm:$0xff]
        %v329 = vld [vmem:[%s200 + $0x238] sm:$0xff]
        %v330 = vld [vmem:[%s200 + $0x240] sm:$0xff]
        %v331 = vld [vmem:[%s200 + $0x248] sm:$0xff]
        %v332 = vld [vmem:[%s200 + $0x250] sm:$0xff]
        %v333 = vld [vmem:[%s200 + $0x258] sm:$0xff]
        %v334 = vld [vmem:[%s200 + $0x260] sm:$0xff]
        %v335 = vld [vmem:[%s200 + $0x268] sm:$0xff]
        %v336 = vld [vmem:[%s200 + $0x270] sm:$0xff]
        %v337 = vld [vmem:[%s200 + $0x278] sm:$0xff]
        %v338 = vld [vmem:[%s200 + $0x280] sm:$0xff]
        %v339 = vld [vmem:[%s200 + $0x288] sm:$0xff]
        %v340 = vld [vmem:[%s200 + $0x290] sm:$0xff]
        %v341 = vld [vmem:[%s200 + $0x298] sm:$0xff]
        %v342 = vld [vmem:[%s200 + $0x2a0] sm:$0xff]
        %v343 = vld [vmem:[%s200 + $0x2a8] sm:$0xff]
        %v344 = vld [vmem:[%s200 + $0x2b0] sm:$0xff]
        %v345 = vld [vmem:[%s200 + $0x2b8] sm:$0xff]
        %v346 = vld [vmem:[%s200 + $0x2c0] sm:$0xff]
        %v347 = vld [vmem:[%s200 + $0x2c8] sm:$0xff]
        %v348 = vld [vmem:[%s200 + $0x2d0] sm:$0xff]
        %v349 = vld [vmem:[%s200 + $0x2d8] sm:$0xff]
        %v350 = vld [vmem:[%s200 + $0x2e0] sm:$0xff]
        %v351 = vld [vmem:[%s200 + $0x2e8] sm:$0xff]
        %v352 = vld [vmem:[%s200 + $0x2f0] sm:$0xff]
        %v353 = vld [vmem:[%s200 + $0x2f8] sm:$0xff]
        %v354 = vld [vmem:[%s200 + $0x300] sm:$0xff]
        %v355 = vld [vmem:[%s200 + $0x308] sm:$0xff]
        %v356 = vld [vmem:[%s200 + $0x310] sm:$0xff]
        %v357 = vld [vmem:[%s200 + $0x318] sm:$0xff]
        %v358 = vld [vmem:[%s200 + $0x320] sm:$0xff]
        %v359 = vld [vmem:[%s200 + $0x328] sm:$0xff]
        %v360 = vld [vmem:[%s200 + $0x330] sm:$0xff]
        %v361 = vld [vmem:[%s200 + $0x338] sm:$0xff]
        %v362 = vld [vmem:[%s200 + $0x340] sm:$0xff]
        %v363 = vld [vmem:[%s200 + $0x348] sm:$0xff]
        %v364 = vld [vmem:[%s200 + $0x350] sm:$0xff]
        %v365 = vld [vmem:[%s200 + $0x358] sm:$0xff]
        %v366 = vld [vmem:[%s200 + $0x360] sm:$0xff]
        %v367 = vld [vmem:[%s200 + $0x368] sm:$0xff]
        %v368 = vld [vmem:[%s200 + $0x370] sm:$0xff]
        %v369 = vld [vmem:[%s200 + $0x378] sm:$0xff]
        %v370 = vld [vmem:[%s200 + $0x380] sm:$0xff]
        %v371 = vld [vmem:[%s200 + $0x388] sm:$0xff]
        %v372 = vld [vmem:[%s200 + $0x390] sm:$0xff]
        %v373 = vld [vmem:[%s200 + $0x398] sm:$0xff]
        %v374 = vld [vmem:[%s200 + $0x3a0] sm:$0xff]
        %v375 = vld [vmem:[%s200 + $0x3a8] sm:$0xff]
        %v376 = vld [vmem:[%s200 + $0x3b0] sm:$0xff]
        %v377 = vld [vmem:[%s200 + $0x3b8] sm:$0xff]
        %v378 = vld [vmem:[%s200 + $0x3c0] sm:$0xff]
        %v379 = vld [vmem:[%s200 + $0x3c8] sm:$0xff]
        %v380 = vld [vmem:[%s200 + $0x3d0] sm:$0xff]
        %v381 = vld [vmem:[%s200 + $0x3d8] sm:$0xff]
        %v382 = vld [vmem:[%s200 + $0x3e0] sm:$0xff]
        %v383 = vld [vmem:[%s200 + $0x3e8] sm:$0xff]
        %v384 = vld [vmem:[%s200 + $0x3f0] sm:$0xff]
        %v385 = vld [vmem:[%s200 + $0x3f8] sm:$0xff]
        %v386 = vunpack.c.l.bf16 %v258
        %v387 = vunpack.c.h.bf16 %v258
        %v388 = vunpack.c.l.bf16 %v259
        %v389 = vunpack.c.h.bf16 %v259
        %v390 = vunpack.c.l.bf16 %v260
        %v391 = vunpack.c.h.bf16 %v260
        %v392 = vunpack.c.l.bf16 %v261
        %v393 = vunpack.c.h.bf16 %v261
        %v394 = vunpack.c.l.bf16 %v262
        %v395 = vunpack.c.h.bf16 %v262
        %v396 = vunpack.c.l.bf16 %v263
        %v397 = vunpack.c.h.bf16 %v263
        %v398 = vunpack.c.l.bf16 %v264
        %v399 = vunpack.c.h.bf16 %v264
        %v400 = vunpack.c.l.bf16 %v265
        %v401 = vunpack.c.h.bf16 %v265
        %v402 = vunpack.c.l.bf16 %v266
        %v403 = vunpack.c.h.bf16 %v266
        %v404 = vunpack.c.l.bf16 %v267
        %v405 = vunpack.c.h.bf16 %v267
        %v406 = vunpack.c.l.bf16 %v268
        %v407 = vunpack.c.h.bf16 %v268
        %v408 = vunpack.c.l.bf16 %v269
        %v409 = vunpack.c.h.bf16 %v269
        %v410 = vunpack.c.l.bf16 %v270
        %v411 = vunpack.c.h.bf16 %v270
        %v412 = vunpack.c.l.bf16 %v271
        %v413 = vunpack.c.h.bf16 %v271
        %v414 = vunpack.c.l.bf16 %v272
        %v415 = vunpack.c.h.bf16 %v272
        %v416 = vunpack.c.l.bf16 %v273
        %v417 = vunpack.c.h.bf16 %v273
        %v418 = vunpack.c.l.bf16 %v274
        %v419 = vunpack.c.h.bf16 %v274
        %v420 = vunpack.c.l.bf16 %v275
        %v421 = vunpack.c.h.bf16 %v275
        %v422 = vunpack.c.l.bf16 %v276
        %v423 = vunpack.c.h.bf16 %v276
        %v424 = vunpack.c.l.bf16 %v277
        %v425 = vunpack.c.h.bf16 %v277
        %v426 = vunpack.c.l.bf16 %v278
        %v427 = vunpack.c.h.bf16 %v278
        %v428 = vunpack.c.l.bf16 %v279
        %v429 = vunpack.c.h.bf16 %v279
        %v430 = vunpack.c.l.bf16 %v280
        %v431 = vunpack.c.h.bf16 %v280
        %v432 = vunpack.c.l.bf16 %v281
        %v433 = vunpack.c.h.bf16 %v281
        %v434 = vunpack.c.l.bf16 %v282
        %v435 = vunpack.c.h.bf16 %v282
        %v436 = vunpack.c.l.bf16 %v283
        %v437 = vunpack.c.h.bf16 %v283
        %v438 = vunpack.c.l.bf16 %v284
        %v439 = vunpack.c.h.bf16 %v284
        %v440 = vunpack.c.l.bf16 %v285
        %v441 = vunpack.c.h.bf16 %v285
        %v442 = vunpack.c.l.bf16 %v286
        %v443 = vunpack.c.h.bf16 %v286
        %v444 = vunpack.c.l.bf16 %v287
        %v445 = vunpack.c.h.bf16 %v287
        %v446 = vunpack.c.l.bf16 %v288
        %v447 = vunpack.c.h.bf16 %v288
        %v448 = vunpack.c.l.bf16 %v289
        %v449 = vunpack.c.h.bf16 %v289
        %v450 = vunpack.c.l.bf16 %v290
        %v451 = vunpack.c.h.bf16 %v290
        %v452 = vunpack.c.l.bf16 %v291
        %v453 = vunpack.c.h.bf16 %v291
        %v454 = vunpack.c.l.bf16 %v292
        %v455 = vunpack.c.h.bf16 %v292
        %v456 = vunpack.c.l.bf16 %v293
        %v457 = vunpack.c.h.bf16 %v293
        %v458 = vunpack.c.l.bf16 %v294
        %v459 = vunpack.c.h.bf16 %v294
        %v460 = vunpack.c.l.bf16 %v295
        %v461 = vunpack.c.h.bf16 %v295
        %v462 = vunpack.c.l.bf16 %v296
        %v463 = vunpack.c.h.bf16 %v296
        %v464 = vunpack.c.l.bf16 %v297
        %v465 = vunpack.c.h.bf16 %v297
        %v466 = vunpack.c.l.bf16 %v298
        %v467 = vunpack.c.h.bf16 %v298
        %v468 = vunpack.c.l.bf16 %v299
        %v469 = vunpack.c.h.bf16 %v299
        %v470 = vunpack.c.l.bf16 %v300
        %v471 = vunpack.c.h.bf16 %v300
        %v472 = vunpack.c.l.bf16 %v301
        %v473 = vunpack.c.h.bf16 %v301
        %v474 = vunpack.c.l.bf16 %v302
        %v475 = vunpack.c.h.bf16 %v302
        %v476 = vunpack.c.l.bf16 %v303
        %v477 = vunpack.c.h.bf16 %v303
        %v478 = vunpack.c.l.bf16 %v304
        %v479 = vunpack.c.h.bf16 %v304
        %v480 = vunpack.c.l.bf16 %v305
        %v481 = vunpack.c.h.bf16 %v305
        %v482 = vunpack.c.l.bf16 %v306
        %v483 = vunpack.c.h.bf16 %v306
        %v484 = vunpack.c.l.bf16 %v307
        %v485 = vunpack.c.h.bf16 %v307
        %v486 = vunpack.c.l.bf16 %v308
        %v487 = vunpack.c.h.bf16 %v308
        %v488 = vunpack.c.l.bf16 %v309
        %v489 = vunpack.c.h.bf16 %v309
        %v490 = vunpack.c.l.bf16 %v310
        %v491 = vunpack.c.h.bf16 %v310
        %v492 = vunpack.c.l.bf16 %v311
        %v493 = vunpack.c.h.bf16 %v311
        %v494 = vunpack.c.l.bf16 %v312
        %v495 = vunpack.c.h.bf16 %v312
        %v496 = vunpack.c.l.bf16 %v313
        %v497 = vunpack.c.h.bf16 %v313
        %v498 = vunpack.c.l.bf16 %v314
        %v499 = vunpack.c.h.bf16 %v314
        %v500 = vunpack.c.l.bf16 %v315
        %v501 = vunpack.c.h.bf16 %v315
        %v502 = vunpack.c.l.bf16 %v316
        %v503 = vunpack.c.h.bf16 %v316
        %v504 = vunpack.c.l.bf16 %v317
        %v505 = vunpack.c.h.bf16 %v317
        %v506 = vunpack.c.l.bf16 %v318
        %v507 = vunpack.c.h.bf16 %v318
        %v508 = vunpack.c.l.bf16 %v319
        %v509 = vunpack.c.h.bf16 %v319
        %v510 = vunpack.c.l.bf16 %v320
        %v511 = vunpack.c.h.bf16 %v320
        %v512 = vunpack.c.l.bf16 %v321
        %v513 = vunpack.c.h.bf16 %v321
        %v514 = vunpack.c.l.bf16 %v322
        %v515 = vunpack.c.h.bf16 %v322
        %v516 = vunpack.c.l.bf16 %v323
        %v517 = vunpack.c.h.bf16 %v323
        %v518 = vunpack.c.l.bf16 %v324
        %v519 = vunpack.c.h.bf16 %v324
        %v520 = vunpack.c.l.bf16 %v325
        %v521 = vunpack.c.h.bf16 %v325
        %v522 = vunpack.c.l.bf16 %v326
        %v523 = vunpack.c.h.bf16 %v326
        %v524 = vunpack.c.l.bf16 %v327
        %v525 = vunpack.c.h.bf16 %v327
        %v526 = vunpack.c.l.bf16 %v328
        %v527 = vunpack.c.h.bf16 %v328
        %v528 = vunpack.c.l.bf16 %v329
        %v529 = vunpack.c.h.bf16 %v329
        %v530 = vunpack.c.l.bf16 %v330
        %v531 = vunpack.c.h.bf16 %v330
        %v532 = vunpack.c.l.bf16 %v331
        %v533 = vunpack.c.h.bf16 %v331
        %v534 = vunpack.c.l.bf16 %v332
        %v535 = vunpack.c.h.bf16 %v332
        %v536 = vunpack.c.l.bf16 %v333
        %v537 = vunpack.c.h.bf16 %v333
        %v538 = vunpack.c.l.bf16 %v334
        %v539 = vunpack.c.h.bf16 %v334
        %v540 = vunpack.c.l.bf16 %v335
        %v541 = vunpack.c.h.bf16 %v335
        %v542 = vunpack.c.l.bf16 %v336
        %v543 = vunpack.c.h.bf16 %v336
        %v544 = vunpack.c.l.bf16 %v337
        %v545 = vunpack.c.h.bf16 %v337
        %v546 = vunpack.c.l.bf16 %v338
        %v547 = vunpack.c.h.bf16 %v338
        %v548 = vunpack.c.l.bf16 %v339
        %v549 = vunpack.c.h.bf16 %v339
        %v550 = vunpack.c.l.bf16 %v340
        %v551 = vunpack.c.h.bf16 %v340
        %v552 = vunpack.c.l.bf16 %v341
        %v553 = vunpack.c.h.bf16 %v341
        %v554 = vunpack.c.l.bf16 %v342
        %v555 = vunpack.c.h.bf16 %v342
        %v556 = vunpack.c.l.bf16 %v343
        %v557 = vunpack.c.h.bf16 %v343
        %v558 = vunpack.c.l.bf16 %v344
        %v559 = vunpack.c.h.bf16 %v344
        %v560 = vunpack.c.l.bf16 %v345
        %v561 = vunpack.c.h.bf16 %v345
        %v562 = vunpack.c.l.bf16 %v346
        %v563 = vunpack.c.h.bf16 %v346
        %v564 = vunpack.c.l.bf16 %v347
        %v565 = vunpack.c.h.bf16 %v347
        %v566 = vunpack.c.l.bf16 %v348
        %v567 = vunpack.c.h.bf16 %v348
        %v568 = vunpack.c.l.bf16 %v349
        %v569 = vunpack.c.h.bf16 %v349
        %v570 = vunpack.c.l.bf16 %v350
        %v571 = vunpack.c.h.bf16 %v350
        %v572 = vunpack.c.l.bf16 %v351
        %v573 = vunpack.c.h.bf16 %v351
        %v574 = vunpack.c.l.bf16 %v352
        %v575 = vunpack.c.h.bf16 %v352
        %v576 = vunpack.c.l.bf16 %v353
        %v577 = vunpack.c.h.bf16 %v353
        %v578 = vunpack.c.l.bf16 %v354
        %v579 = vunpack.c.h.bf16 %v354
        %v580 = vunpack.c.l.bf16 %v355
        %v581 = vunpack.c.h.bf16 %v355
        %v582 = vunpack.c.l.bf16 %v356
        %v583 = vunpack.c.h.bf16 %v356
        %v584 = vunpack.c.l.bf16 %v357
        %v585 = vunpack.c.h.bf16 %v357
        %v586 = vunpack.c.l.bf16 %v358
        %v587 = vunpack.c.h.bf16 %v358
        %v588 = vunpack.c.l.bf16 %v359
        %v589 = vunpack.c.h.bf16 %v359
        %v590 = vunpack.c.l.bf16 %v360
        %v591 = vunpack.c.h.bf16 %v360
        %v592 = vunpack.c.l.bf16 %v361
        %v593 = vunpack.c.h.bf16 %v361
        %v594 = vunpack.c.l.bf16 %v362
        %v595 = vunpack.c.h.bf16 %v362
        %v596 = vunpack.c.l.bf16 %v363
        %v597 = vunpack.c.h.bf16 %v363
        %v598 = vunpack.c.l.bf16 %v364
        %v599 = vunpack.c.h.bf16 %v364
        %v600 = vunpack.c.l.bf16 %v365
        %v601 = vunpack.c.h.bf16 %v365
        %v602 = vunpack.c.l.bf16 %v366
        %v603 = vunpack.c.h.bf16 %v366
        %v604 = vunpack.c.l.bf16 %v367
        %v605 = vunpack.c.h.bf16 %v367
        %v606 = vunpack.c.l.bf16 %v368
        %v607 = vunpack.c.h.bf16 %v368
        %v608 = vunpack.c.l.bf16 %v369
        %v609 = vunpack.c.h.bf16 %v369
        %v610 = vunpack.c.l.bf16 %v370
        %v611 = vunpack.c.h.bf16 %v370
        %v612 = vunpack.c.l.bf16 %v371
        %v613 = vunpack.c.h.bf16 %v371
        %v614 = vunpack.c.l.bf16 %v372
        %v615 = vunpack.c.h.bf16 %v372
        %v616 = vunpack.c.l.bf16 %v373
        %v617 = vunpack.c.h.bf16 %v373
        %v618 = vunpack.c.l.bf16 %v374
        %v619 = vunpack.c.h.bf16 %v374
        %v620 = vunpack.c.l.bf16 %v375
        %v621 = vunpack.c.h.bf16 %v375
        %v622 = vunpack.c.l.bf16 %v376
        %v623 = vunpack.c.h.bf16 %v376
        %v624 = vunpack.c.l.bf16 %v377
        %v625 = vunpack.c.h.bf16 %v377
        %v626 = vunpack.c.l.bf16 %v378
        %v627 = vunpack.c.h.bf16 %v378
        %v628 = vunpack.c.l.bf16 %v379
        %v629 = vunpack.c.h.bf16 %v379
        %v630 = vunpack.c.l.bf16 %v380
        %v631 = vunpack.c.h.bf16 %v380
        %v632 = vunpack.c.l.bf16 %v381
        %v633 = vunpack.c.h.bf16 %v381
        %v634 = vunpack.c.l.bf16 %v382
        %v635 = vunpack.c.h.bf16 %v382
        %v636 = vunpack.c.l.bf16 %v383
        %v637 = vunpack.c.h.bf16 %v383
        %v638 = vunpack.c.l.bf16 %v384
        %v639 = vunpack.c.h.bf16 %v384
        %v640 = vunpack.c.l.bf16 %v385
        %v641 = vunpack.c.h.bf16 %v385
        %v642 = vld [vmem:[%s210] sm:$0xff]
        %v643 = vld [vmem:[%s210 + $0x8] sm:$0xff]
        %v644 = vld [vmem:[%s210 + $0x10] sm:$0xff]
        %v645 = vld [vmem:[%s210 + $0x18] sm:$0xff]
        %v646 = vld [vmem:[%s210 + $0x20] sm:$0xff]
        %v647 = vld [vmem:[%s210 + $0x28] sm:$0xff]
        %v648 = vld [vmem:[%s210 + $0x30] sm:$0xff]
        %v649 = vld [vmem:[%s210 + $0x38] sm:$0xff]
        %v650 = vld [vmem:[%s210 + $0x40] sm:$0xff]
        %v651 = vld [vmem:[%s210 + $0x48] sm:$0xff]
        %v652 = vld [vmem:[%s210 + $0x50] sm:$0xff]
        %v653 = vld [vmem:[%s210 + $0x58] sm:$0xff]
        %v654 = vld [vmem:[%s210 + $0x60] sm:$0xff]
        %v655 = vld [vmem:[%s210 + $0x68] sm:$0xff]
        %v656 = vld [vmem:[%s210 + $0x70] sm:$0xff]
        %v657 = vld [vmem:[%s210 + $0x78] sm:$0xff]
        %v658 = vld [vmem:[%s210 + $0x80] sm:$0xff]
        %v659 = vld [vmem:[%s210 + $0x88] sm:$0xff]
        %v660 = vld [vmem:[%s210 + $0x90] sm:$0xff]
        %v661 = vld [vmem:[%s210 + $0x98] sm:$0xff]
        %v662 = vld [vmem:[%s210 + $0xa0] sm:$0xff]
        %v663 = vld [vmem:[%s210 + $0xa8] sm:$0xff]
        %v664 = vld [vmem:[%s210 + $0xb0] sm:$0xff]
        %v665 = vld [vmem:[%s210 + $0xb8] sm:$0xff]
        %v666 = vld [vmem:[%s210 + $0xc0] sm:$0xff]
        %v667 = vld [vmem:[%s210 + $0xc8] sm:$0xff]
        %v668 = vld [vmem:[%s210 + $0xd0] sm:$0xff]
        %v669 = vld [vmem:[%s210 + $0xd8] sm:$0xff]
        %v670 = vld [vmem:[%s210 + $0xe0] sm:$0xff]
        %v671 = vld [vmem:[%s210 + $0xe8] sm:$0xff]
        %v672 = vld [vmem:[%s210 + $0xf0] sm:$0xff]
        %v673 = vld [vmem:[%s210 + $0xf8] sm:$0xff]
        %v674 = vld [vmem:[%s210 + $0x100] sm:$0xff]
        %v675 = vld [vmem:[%s210 + $0x108] sm:$0xff]
        %v676 = vld [vmem:[%s210 + $0x110] sm:$0xff]
        %v677 = vld [vmem:[%s210 + $0x118] sm:$0xff]
        %v678 = vld [vmem:[%s210 + $0x120] sm:$0xff]
        %v679 = vld [vmem:[%s210 + $0x128] sm:$0xff]
        %v680 = vld [vmem:[%s210 + $0x130] sm:$0xff]
        %v681 = vld [vmem:[%s210 + $0x138] sm:$0xff]
        %v682 = vld [vmem:[%s210 + $0x140] sm:$0xff]
        %v683 = vld [vmem:[%s210 + $0x148] sm:$0xff]
        %v684 = vld [vmem:[%s210 + $0x150] sm:$0xff]
        %v685 = vld [vmem:[%s210 + $0x158] sm:$0xff]
        %v686 = vld [vmem:[%s210 + $0x160] sm:$0xff]
        %v687 = vld [vmem:[%s210 + $0x168] sm:$0xff]
        %v688 = vld [vmem:[%s210 + $0x170] sm:$0xff]
        %v689 = vld [vmem:[%s210 + $0x178] sm:$0xff]
        %v690 = vld [vmem:[%s210 + $0x180] sm:$0xff]
        %v691 = vld [vmem:[%s210 + $0x188] sm:$0xff]
        %v692 = vld [vmem:[%s210 + $0x190] sm:$0xff]
        %v693 = vld [vmem:[%s210 + $0x198] sm:$0xff]
        %v694 = vld [vmem:[%s210 + $0x1a0] sm:$0xff]
        %v695 = vld [vmem:[%s210 + $0x1a8] sm:$0xff]
        %v696 = vld [vmem:[%s210 + $0x1b0] sm:$0xff]
        %v697 = vld [vmem:[%s210 + $0x1b8] sm:$0xff]
        %v698 = vld [vmem:[%s210 + $0x1c0] sm:$0xff]
        %v699 = vld [vmem:[%s210 + $0x1c8] sm:$0xff]
        %v700 = vld [vmem:[%s210 + $0x1d0] sm:$0xff]
        %v701 = vld [vmem:[%s210 + $0x1d8] sm:$0xff]
        %v702 = vld [vmem:[%s210 + $0x1e0] sm:$0xff]
        %v703 = vld [vmem:[%s210 + $0x1e8] sm:$0xff]
        %v704 = vld [vmem:[%s210 + $0x1f0] sm:$0xff]
        %v705 = vld [vmem:[%s210 + $0x1f8] sm:$0xff]
        %v706 = vld [vmem:[%s210 + $0x200] sm:$0xff]
        %v707 = vld [vmem:[%s210 + $0x208] sm:$0xff]
        %v708 = vld [vmem:[%s210 + $0x210] sm:$0xff]
        %v709 = vld [vmem:[%s210 + $0x218] sm:$0xff]
        %v710 = vld [vmem:[%s210 + $0x220] sm:$0xff]
        %v711 = vld [vmem:[%s210 + $0x228] sm:$0xff]
        %v712 = vld [vmem:[%s210 + $0x230] sm:$0xff]
        %v713 = vld [vmem:[%s210 + $0x238] sm:$0xff]
        %v714 = vld [vmem:[%s210 + $0x240] sm:$0xff]
        %v715 = vld [vmem:[%s210 + $0x248] sm:$0xff]
        %v716 = vld [vmem:[%s210 + $0x250] sm:$0xff]
        %v717 = vld [vmem:[%s210 + $0x258] sm:$0xff]
        %v718 = vld [vmem:[%s210 + $0x260] sm:$0xff]
        %v719 = vld [vmem:[%s210 + $0x268] sm:$0xff]
        %v720 = vld [vmem:[%s210 + $0x270] sm:$0xff]
        %v721 = vld [vmem:[%s210 + $0x278] sm:$0xff]
        %v722 = vld [vmem:[%s210 + $0x280] sm:$0xff]
        %v723 = vld [vmem:[%s210 + $0x288] sm:$0xff]
        %v724 = vld [vmem:[%s210 + $0x290] sm:$0xff]
        %v725 = vld [vmem:[%s210 + $0x298] sm:$0xff]
        %v726 = vld [vmem:[%s210 + $0x2a0] sm:$0xff]
        %v727 = vld [vmem:[%s210 + $0x2a8] sm:$0xff]
        %v728 = vld [vmem:[%s210 + $0x2b0] sm:$0xff]
        %v729 = vld [vmem:[%s210 + $0x2b8] sm:$0xff]
        %v730 = vld [vmem:[%s210 + $0x2c0] sm:$0xff]
        %v731 = vld [vmem:[%s210 + $0x2c8] sm:$0xff]
        %v732 = vld [vmem:[%s210 + $0x2d0] sm:$0xff]
        %v733 = vld [vmem:[%s210 + $0x2d8] sm:$0xff]
        %v734 = vld [vmem:[%s210 + $0x2e0] sm:$0xff]
        %v735 = vld [vmem:[%s210 + $0x2e8] sm:$0xff]
        %v736 = vld [vmem:[%s210 + $0x2f0] sm:$0xff]
        %v737 = vld [vmem:[%s210 + $0x2f8] sm:$0xff]
        %v738 = vld [vmem:[%s210 + $0x300] sm:$0xff]
        %v739 = vld [vmem:[%s210 + $0x308] sm:$0xff]
        %v740 = vld [vmem:[%s210 + $0x310] sm:$0xff]
        %v741 = vld [vmem:[%s210 + $0x318] sm:$0xff]
        %v742 = vld [vmem:[%s210 + $0x320] sm:$0xff]
        %v743 = vld [vmem:[%s210 + $0x328] sm:$0xff]
        %v744 = vld [vmem:[%s210 + $0x330] sm:$0xff]
        %v745 = vld [vmem:[%s210 + $0x338] sm:$0xff]
        %v746 = vld [vmem:[%s210 + $0x340] sm:$0xff]
        %v747 = vld [vmem:[%s210 + $0x348] sm:$0xff]
        %v748 = vld [vmem:[%s210 + $0x350] sm:$0xff]
        %v749 = vld [vmem:[%s210 + $0x358] sm:$0xff]
        %v750 = vld [vmem:[%s210 + $0x360] sm:$0xff]
        %v751 = vld [vmem:[%s210 + $0x368] sm:$0xff]
        %v752 = vld [vmem:[%s210 + $0x370] sm:$0xff]
        %v753 = vld [vmem:[%s210 + $0x378] sm:$0xff]
        %v754 = vld [vmem:[%s210 + $0x380] sm:$0xff]
        %v755 = vld [vmem:[%s210 + $0x388] sm:$0xff]
        %v756 = vld [vmem:[%s210 + $0x390] sm:$0xff]
        %v757 = vld [vmem:[%s210 + $0x398] sm:$0xff]
        %v758 = vld [vmem:[%s210 + $0x3a0] sm:$0xff]
        %v759 = vld [vmem:[%s210 + $0x3a8] sm:$0xff]
        %v760 = vld [vmem:[%s210 + $0x3b0] sm:$0xff]
        %v761 = vld [vmem:[%s210 + $0x3b8] sm:$0xff]
        %v762 = vld [vmem:[%s210 + $0x3c0] sm:$0xff]
        %v763 = vld [vmem:[%s210 + $0x3c8] sm:$0xff]
        %v764 = vld [vmem:[%s210 + $0x3d0] sm:$0xff]
        %v765 = vld [vmem:[%s210 + $0x3d8] sm:$0xff]
        %v766 = vld [vmem:[%s210 + $0x3e0] sm:$0xff]
        %v767 = vld [vmem:[%s210 + $0x3e8] sm:$0xff]
        %v768 = vld [vmem:[%s210 + $0x3f0] sm:$0xff]
        %v769 = vld [vmem:[%s210 + $0x3f8] sm:$0xff]
        %v770 = vunpack.c.l.bf16 %v642
        %v771 = vunpack.c.h.bf16 %v642
        %v772 = vunpack.c.l.bf16 %v643
        %v773 = vunpack.c.h.bf16 %v643
        %v774 = vunpack.c.l.bf16 %v644
        %v775 = vunpack.c.h.bf16 %v644
        %v776 = vunpack.c.l.bf16 %v645
        %v777 = vunpack.c.h.bf16 %v645
        %v778 = vunpack.c.l.bf16 %v646
        %v779 = vunpack.c.h.bf16 %v646
        %v780 = vunpack.c.l.bf16 %v647
        %v781 = vunpack.c.h.bf16 %v647
        %v782 = vunpack.c.l.bf16 %v648
        %v783 = vunpack.c.h.bf16 %v648
        %v784 = vunpack.c.l.bf16 %v649
        %v785 = vunpack.c.h.bf16 %v649
        %v786 = vunpack.c.l.bf16 %v650
        %v787 = vunpack.c.h.bf16 %v650
        %v788 = vunpack.c.l.bf16 %v651
        %v789 = vunpack.c.h.bf16 %v651
        %v790 = vunpack.c.l.bf16 %v652
        %v791 = vunpack.c.h.bf16 %v652
        %v792 = vunpack.c.l.bf16 %v653
        %v793 = vunpack.c.h.bf16 %v653
        %v794 = vunpack.c.l.bf16 %v654
        %v795 = vunpack.c.h.bf16 %v654
        %v796 = vunpack.c.l.bf16 %v655
        %v797 = vunpack.c.h.bf16 %v655
        %v798 = vunpack.c.l.bf16 %v656
        %v799 = vunpack.c.h.bf16 %v656
        %v800 = vunpack.c.l.bf16 %v657
        %v801 = vunpack.c.h.bf16 %v657
        %v802 = vunpack.c.l.bf16 %v658
        %v803 = vunpack.c.h.bf16 %v658
        %v804 = vunpack.c.l.bf16 %v659
        %v805 = vunpack.c.h.bf16 %v659
        %v806 = vunpack.c.l.bf16 %v660
        %v807 = vunpack.c.h.bf16 %v660
        %v808 = vunpack.c.l.bf16 %v661
        %v809 = vunpack.c.h.bf16 %v661
        %v810 = vunpack.c.l.bf16 %v662
        %v811 = vunpack.c.h.bf16 %v662
        %v812 = vunpack.c.l.bf16 %v663
        %v813 = vunpack.c.h.bf16 %v663
        %v814 = vunpack.c.l.bf16 %v664
        %v815 = vunpack.c.h.bf16 %v664
        %v816 = vunpack.c.l.bf16 %v665
        %v817 = vunpack.c.h.bf16 %v665
        %v818 = vunpack.c.l.bf16 %v666
        %v819 = vunpack.c.h.bf16 %v666
        %v820 = vunpack.c.l.bf16 %v667
        %v821 = vunpack.c.h.bf16 %v667
        %v822 = vunpack.c.l.bf16 %v668
        %v823 = vunpack.c.h.bf16 %v668
        %v824 = vunpack.c.l.bf16 %v669
        %v825 = vunpack.c.h.bf16 %v669
        %v826 = vunpack.c.l.bf16 %v670
        %v827 = vunpack.c.h.bf16 %v670
        %v828 = vunpack.c.l.bf16 %v671
        %v829 = vunpack.c.h.bf16 %v671
        %v830 = vunpack.c.l.bf16 %v672
        %v831 = vunpack.c.h.bf16 %v672
        %v832 = vunpack.c.l.bf16 %v673
        %v833 = vunpack.c.h.bf16 %v673
        %v834 = vunpack.c.l.bf16 %v674
        %v835 = vunpack.c.h.bf16 %v674
        %v836 = vunpack.c.l.bf16 %v675
        %v837 = vunpack.c.h.bf16 %v675
        %v838 = vunpack.c.l.bf16 %v676
        %v839 = vunpack.c.h.bf16 %v676
        %v840 = vunpack.c.l.bf16 %v677
        %v841 = vunpack.c.h.bf16 %v677
        %v842 = vunpack.c.l.bf16 %v678
        %v843 = vunpack.c.h.bf16 %v678
        %v844 = vunpack.c.l.bf16 %v679
        %v845 = vunpack.c.h.bf16 %v679
        %v846 = vunpack.c.l.bf16 %v680
        %v847 = vunpack.c.h.bf16 %v680
        %v848 = vunpack.c.l.bf16 %v681
        %v849 = vunpack.c.h.bf16 %v681
        %v850 = vunpack.c.l.bf16 %v682
        %v851 = vunpack.c.h.bf16 %v682
        %v852 = vunpack.c.l.bf16 %v683
        %v853 = vunpack.c.h.bf16 %v683
        %v854 = vunpack.c.l.bf16 %v684
        %v855 = vunpack.c.h.bf16 %v684
        %v856 = vunpack.c.l.bf16 %v685
        %v857 = vunpack.c.h.bf16 %v685
        %v858 = vunpack.c.l.bf16 %v686
        %v859 = vunpack.c.h.bf16 %v686
        %v860 = vunpack.c.l.bf16 %v687
        %v861 = vunpack.c.h.bf16 %v687
        %v862 = vunpack.c.l.bf16 %v688
        %v863 = vunpack.c.h.bf16 %v688
        %v864 = vunpack.c.l.bf16 %v689
        %v865 = vunpack.c.h.bf16 %v689
        %v866 = vunpack.c.l.bf16 %v690
        %v867 = vunpack.c.h.bf16 %v690
        %v868 = vunpack.c.l.bf16 %v691
        %v869 = vunpack.c.h.bf16 %v691
        %v870 = vunpack.c.l.bf16 %v692
        %v871 = vunpack.c.h.bf16 %v692
        %v872 = vunpack.c.l.bf16 %v693
        %v873 = vunpack.c.h.bf16 %v693
        %v874 = vunpack.c.l.bf16 %v694
        %v875 = vunpack.c.h.bf16 %v694
        %v876 = vunpack.c.l.bf16 %v695
        %v877 = vunpack.c.h.bf16 %v695
        %v878 = vunpack.c.l.bf16 %v696
        %v879 = vunpack.c.h.bf16 %v696
        %v880 = vunpack.c.l.bf16 %v697
        %v881 = vunpack.c.h.bf16 %v697
        %v882 = vunpack.c.l.bf16 %v698
        %v883 = vunpack.c.h.bf16 %v698
        %v884 = vunpack.c.l.bf16 %v699
        %v885 = vunpack.c.h.bf16 %v699
        %v886 = vunpack.c.l.bf16 %v700
        %v887 = vunpack.c.h.bf16 %v700
        %v888 = vunpack.c.l.bf16 %v701
        %v889 = vunpack.c.h.bf16 %v701
        %v890 = vunpack.c.l.bf16 %v702
        %v891 = vunpack.c.h.bf16 %v702
        %v892 = vunpack.c.l.bf16 %v703
        %v893 = vunpack.c.h.bf16 %v703
        %v894 = vunpack.c.l.bf16 %v704
        %v895 = vunpack.c.h.bf16 %v704
        %v896 = vunpack.c.l.bf16 %v705
        %v897 = vunpack.c.h.bf16 %v705
        %v898 = vunpack.c.l.bf16 %v706
        %v899 = vunpack.c.h.bf16 %v706
        %v900 = vunpack.c.l.bf16 %v707
        %v901 = vunpack.c.h.bf16 %v707
        %v902 = vunpack.c.l.bf16 %v708
        %v903 = vunpack.c.h.bf16 %v708
        %v904 = vunpack.c.l.bf16 %v709
        %v905 = vunpack.c.h.bf16 %v709
        %v906 = vunpack.c.l.bf16 %v710
        %v907 = vunpack.c.h.bf16 %v710
        %v908 = vunpack.c.l.bf16 %v711
        %v909 = vunpack.c.h.bf16 %v711
        %v910 = vunpack.c.l.bf16 %v712
        %v911 = vunpack.c.h.bf16 %v712
        %v912 = vunpack.c.l.bf16 %v713
        %v913 = vunpack.c.h.bf16 %v713
        %v914 = vunpack.c.l.bf16 %v714
        %v915 = vunpack.c.h.bf16 %v714
        %v916 = vunpack.c.l.bf16 %v715
        %v917 = vunpack.c.h.bf16 %v715
        %v918 = vunpack.c.l.bf16 %v716
        %v919 = vunpack.c.h.bf16 %v716
        %v920 = vunpack.c.l.bf16 %v717
        %v921 = vunpack.c.h.bf16 %v717
        %v922 = vunpack.c.l.bf16 %v718
        %v923 = vunpack.c.h.bf16 %v718
        %v924 = vunpack.c.l.bf16 %v719
        %v925 = vunpack.c.h.bf16 %v719
        %v926 = vunpack.c.l.bf16 %v720
        %v927 = vunpack.c.h.bf16 %v720
        %v928 = vunpack.c.l.bf16 %v721
        %v929 = vunpack.c.h.bf16 %v721
        %v930 = vunpack.c.l.bf16 %v722
        %v931 = vunpack.c.h.bf16 %v722
        %v932 = vunpack.c.l.bf16 %v723
        %v933 = vunpack.c.h.bf16 %v723
        %v934 = vunpack.c.l.bf16 %v724
        %v935 = vunpack.c.h.bf16 %v724
        %v936 = vunpack.c.l.bf16 %v725
        %v937 = vunpack.c.h.bf16 %v725
        %v938 = vunpack.c.l.bf16 %v726
        %v939 = vunpack.c.h.bf16 %v726
        %v940 = vunpack.c.l.bf16 %v727
        %v941 = vunpack.c.h.bf16 %v727
        %v942 = vunpack.c.l.bf16 %v728
        %v943 = vunpack.c.h.bf16 %v728
        %v944 = vunpack.c.l.bf16 %v729
        %v945 = vunpack.c.h.bf16 %v729
        %v946 = vunpack.c.l.bf16 %v730
        %v947 = vunpack.c.h.bf16 %v730
        %v948 = vunpack.c.l.bf16 %v731
        %v949 = vunpack.c.h.bf16 %v731
        %v950 = vunpack.c.l.bf16 %v732
        %v951 = vunpack.c.h.bf16 %v732
        %v952 = vunpack.c.l.bf16 %v733
        %v953 = vunpack.c.h.bf16 %v733
        %v954 = vunpack.c.l.bf16 %v734
        %v955 = vunpack.c.h.bf16 %v734
        %v956 = vunpack.c.l.bf16 %v735
        %v957 = vunpack.c.h.bf16 %v735
        %v958 = vunpack.c.l.bf16 %v736
        %v959 = vunpack.c.h.bf16 %v736
        %v960 = vunpack.c.l.bf16 %v737
        %v961 = vunpack.c.h.bf16 %v737
        %v962 = vunpack.c.l.bf16 %v738
        %v963 = vunpack.c.h.bf16 %v738
        %v964 = vunpack.c.l.bf16 %v739
        %v965 = vunpack.c.h.bf16 %v739
        %v966 = vunpack.c.l.bf16 %v740
        %v967 = vunpack.c.h.bf16 %v740
        %v968 = vunpack.c.l.bf16 %v741
        %v969 = vunpack.c.h.bf16 %v741
        %v970 = vunpack.c.l.bf16 %v742
        %v971 = vunpack.c.h.bf16 %v742
        %v972 = vunpack.c.l.bf16 %v743
        %v973 = vunpack.c.h.bf16 %v743
        %v974 = vunpack.c.l.bf16 %v744
        %v975 = vunpack.c.h.bf16 %v744
        %v976 = vunpack.c.l.bf16 %v745
        %v977 = vunpack.c.h.bf16 %v745
        %v978 = vunpack.c.l.bf16 %v746
        %v979 = vunpack.c.h.bf16 %v746
        %v980 = vunpack.c.l.bf16 %v747
        %v981 = vunpack.c.h.bf16 %v747
        %v982 = vunpack.c.l.bf16 %v748
        %v983 = vunpack.c.h.bf16 %v748
        %v984 = vunpack.c.l.bf16 %v749
        %v985 = vunpack.c.h.bf16 %v749
        %v986 = vunpack.c.l.bf16 %v750
        %v987 = vunpack.c.h.bf16 %v750
        %v988 = vunpack.c.l.bf16 %v751
        %v989 = vunpack.c.h.bf16 %v751
        %v990 = vunpack.c.l.bf16 %v752
        %v991 = vunpack.c.h.bf16 %v752
        %v992 = vunpack.c.l.bf16 %v753
        %v993 = vunpack.c.h.bf16 %v753
        %v994 = vunpack.c.l.bf16 %v754
        %v995 = vunpack.c.h.bf16 %v754
        %v996 = vunpack.c.l.bf16 %v755
        %v997 = vunpack.c.h.bf16 %v755
        %v998 = vunpack.c.l.bf16 %v756
        %v999 = vunpack.c.h.bf16 %v756
        %v1000 = vunpack.c.l.bf16 %v757
        %v1001 = vunpack.c.h.bf16 %v757
        %v1002 = vunpack.c.l.bf16 %v758
        %v1003 = vunpack.c.h.bf16 %v758
        %v1004 = vunpack.c.l.bf16 %v759
        %v1005 = vunpack.c.h.bf16 %v759
        %v1006 = vunpack.c.l.bf16 %v760
        %v1007 = vunpack.c.h.bf16 %v760
        %v1008 = vunpack.c.l.bf16 %v761
        %v1009 = vunpack.c.h.bf16 %v761
        %v1010 = vunpack.c.l.bf16 %v762
        %v1011 = vunpack.c.h.bf16 %v762
        %v1012 = vunpack.c.l.bf16 %v763
        %v1013 = vunpack.c.h.bf16 %v763
        %v1014 = vunpack.c.l.bf16 %v764
        %v1015 = vunpack.c.h.bf16 %v764
        %v1016 = vunpack.c.l.bf16 %v765
        %v1017 = vunpack.c.h.bf16 %v765
        %v1018 = vunpack.c.l.bf16 %v766
        %v1019 = vunpack.c.h.bf16 %v766
        %v1020 = vunpack.c.l.bf16 %v767
        %v1021 = vunpack.c.h.bf16 %v767
        %v1022 = vunpack.c.l.bf16 %v768
        %v1023 = vunpack.c.h.bf16 %v768
        %v1024 = vunpack.c.l.bf16 %v769
        %v1025 = vunpack.c.h.bf16 %v769
        %1026 = vmatpush.msra.mxu0 %v416
        %1027 = vmatpush.msra.mxu0 %v414
        %1028 = vmatpush.msra.mxu0 %v412
        %1029 = vmatpush.msra.mxu0 %v410
        %1030 = vmatpush.msra.mxu0 %v408
        %1031 = vmatpush.msra.mxu0 %v406
        %1032 = vmatpush.msra.mxu0 %v404
        %1033 = vmatpush.msra.mxu0 %v402
        %1034 = vmatpush.msra.mxu0 %v400
        %1035 = vmatpush.msra.mxu0 %v398
        %1036 = vmatpush.msra.mxu0 %v396
        %1037 = vmatpush.msra.mxu0 %v394
        %1038 = vmatpush.msra.mxu0 %v392
        %1039 = vmatpush.msra.mxu0 %v390
        %1040 = vmatpush.msra.mxu0 %v388
        %1041 = vmatpush.msra.mxu0 %v386
        %1042 = vmatmul.f32.gmra.mxu0 %v242
        %v1043 = vpop.f32.mrf.mxu0
        %v1044 = vadd.f32 0.0, %v1043
        %1045 = vmatmul.f32.gmra.mxu0 %v250
        %v1046 = vpop.f32.mrf.mxu0
        %v1047 = vadd.f32 0.0, %v1046
        %1048 = vdwg.mxu0
        %1049 = vmatpush.msra.mxu0 %v448
        %1050 = vmatpush.msra.mxu0 %v446
        %1051 = vmatpush.msra.mxu0 %v444
        %1052 = vmatpush.msra.mxu0 %v442
        %1053 = vmatpush.msra.mxu0 %v440
        %1054 = vmatpush.msra.mxu0 %v438
        %1055 = vmatpush.msra.mxu0 %v436
        %1056 = vmatpush.msra.mxu0 %v434
        %1057 = vmatpush.msra.mxu0 %v432
        %1058 = vmatpush.msra.mxu0 %v430
        %1059 = vmatpush.msra.mxu0 %v428
        %1060 = vmatpush.msra.mxu0 %v426
        %1061 = vmatpush.msra.mxu0 %v424
        %1062 = vmatpush.msra.mxu0 %v422
        %1063 = vmatpush.msra.mxu0 %v420
        %1064 = vmatpush.msra.mxu0 %v418
        %1065 = vmatmul.f32.gmra.mxu0 %v243
        %v1066 = vpop.f32.mrf.mxu0
        %v1067 = vadd.f32 %v1044, %v1066
        %1068 = vmatmul.f32.gmra.mxu0 %v251
        %v1069 = vpop.f32.mrf.mxu0
        %v1070 = vadd.f32 %v1047, %v1069
        %1071 = vdwg.mxu0
        %1072 = vmatpush.msra.mxu0 %v480
        %1073 = vmatpush.msra.mxu0 %v478
        %1074 = vmatpush.msra.mxu0 %v476
        %1075 = vmatpush.msra.mxu0 %v474
        %1076 = vmatpush.msra.mxu0 %v472
        %1077 = vmatpush.msra.mxu0 %v470
        %1078 = vmatpush.msra.mxu0 %v468
        %1079 = vmatpush.msra.mxu0 %v466
        %1080 = vmatpush.msra.mxu0 %v464
        %1081 = vmatpush.msra.mxu0 %v462
        %1082 = vmatpush.msra.mxu0 %v460
        %1083 = vmatpush.msra.mxu0 %v458
        %1084 = vmatpush.msra.mxu0 %v456
        %1085 = vmatpush.msra.mxu0 %v454
        %1086 = vmatpush.msra.mxu0 %v452
        %1087 = vmatpush.msra.mxu0 %v450
        %1088 = vmatmul.f32.gmra.mxu0 %v244
        %v1089 = vpop.f32.mrf.mxu0
        %v1090 = vadd.f32 %v1067, %v1089
        %1091 = vmatmul.f32.gmra.mxu0 %v252
        %v1092 = vpop.f32.mrf.mxu0
        %v1093 = vadd.f32 %v1070, %v1092
        %1094 = vdwg.mxu0
        %1095 = vmatpush.msra.mxu0 %v512
        %1096 = vmatpush.msra.mxu0 %v510
        %1097 = vmatpush.msra.mxu0 %v508
        %1098 = vmatpush.msra.mxu0 %v506
        %1099 = vmatpush.msra.mxu0 %v504
        %1100 = vmatpush.msra.mxu0 %v502
        %1101 = vmatpush.msra.mxu0 %v500
        %1102 = vmatpush.msra.mxu0 %v498
        %1103 = vmatpush.msra.mxu0 %v496
        %1104 = vmatpush.msra.mxu0 %v494
        %1105 = vmatpush.msra.mxu0 %v492
        %1106 = vmatpush.msra.mxu0 %v490
        %1107 = vmatpush.msra.mxu0 %v488
        %1108 = vmatpush.msra.mxu0 %v486
        %1109 = vmatpush.msra.mxu0 %v484
        %1110 = vmatpush.msra.mxu0 %v482
        %1111 = vmatmul.f32.gmra.mxu0 %v245
        %v1112 = vpop.f32.mrf.mxu0
        %v1113 = vadd.f32 %v1090, %v1112
        %1114 = vmatmul.f32.gmra.mxu0 %v253
        %v1115 = vpop.f32.mrf.mxu0
        %v1116 = vadd.f32 %v1093, %v1115
        %1117 = vdwg.mxu0
        %1118 = vmatpush.msra.mxu0 %v544
        %1119 = vmatpush.msra.mxu0 %v542
        %1120 = vmatpush.msra.mxu0 %v540
        %1121 = vmatpush.msra.mxu0 %v538
        %1122 = vmatpush.msra.mxu0 %v536
        %1123 = vmatpush.msra.mxu0 %v534
        %1124 = vmatpush.msra.mxu0 %v532
        %1125 = vmatpush.msra.mxu0 %v530
        %1126 = vmatpush.msra.mxu0 %v528
        %1127 = vmatpush.msra.mxu0 %v526
        %1128 = vmatpush.msra.mxu0 %v524
        %1129 = vmatpush.msra.mxu0 %v522
        %1130 = vmatpush.msra.mxu0 %v520
        %1131 = vmatpush.msra.mxu0 %v518
        %1132 = vmatpush.msra.mxu0 %v516
        %1133 = vmatpush.msra.mxu0 %v514
        %1134 = vmatmul.f32.gmra.mxu0 %v246
        %v1135 = vpop.f32.mrf.mxu0
        %v1136 = vadd.f32 %v1113, %v1135
        %1137 = vmatmul.f32.gmra.mxu0 %v254
        %v1138 = vpop.f32.mrf.mxu0
        %v1139 = vadd.f32 %v1116, %v1138
        %1140 = vdwg.mxu0
        %1141 = vmatpush.msra.mxu0 %v576
        %1142 = vmatpush.msra.mxu0 %v574
        %1143 = vmatpush.msra.mxu0 %v572
        %1144 = vmatpush.msra.mxu0 %v570
        %1145 = vmatpush.msra.mxu0 %v568
        %1146 = vmatpush.msra.mxu0 %v566
        %1147 = vmatpush.msra.mxu0 %v564
        %1148 = vmatpush.msra.mxu0 %v562
        %1149 = vmatpush.msra.mxu0 %v560
        %1150 = vmatpush.msra.mxu0 %v558
        %1151 = vmatpush.msra.mxu0 %v556
        %1152 = vmatpush.msra.mxu0 %v554
        %1153 = vmatpush.msra.mxu0 %v552
        %1154 = vmatpush.msra.mxu0 %v550
        %1155 = vmatpush.msra.mxu0 %v548
        %1156 = vmatpush.msra.mxu0 %v546
        %1157 = vmatmul.f32.gmra.mxu0 %v247
        %v1158 = vpop.f32.mrf.mxu0
        %v1159 = vadd.f32 %v1136, %v1158
        %1160 = vmatmul.f32.gmra.mxu0 %v255
        %v1161 = vpop.f32.mrf.mxu0
        %v1162 = vadd.f32 %v1139, %v1161
        %1163 = vdwg.mxu0
        %1164 = vmatpush.msra.mxu0 %v608
        %1165 = vmatpush.msra.mxu0 %v606
        %1166 = vmatpush.msra.mxu0 %v604
        %1167 = vmatpush.msra.mxu0 %v602
        %1168 = vmatpush.msra.mxu0 %v600
        %1169 = vmatpush.msra.mxu0 %v598
        %1170 = vmatpush.msra.mxu0 %v596
        %1171 = vmatpush.msra.mxu0 %v594
        %1172 = vmatpush.msra.mxu0 %v592
        %1173 = vmatpush.msra.mxu0 %v590
        %1174 = vmatpush.msra.mxu0 %v588
        %1175 = vmatpush.msra.mxu0 %v586
        %1176 = vmatpush.msra.mxu0 %v584
        %1177 = vmatpush.msra.mxu0 %v582
        %1178 = vmatpush.msra.mxu0 %v580
        %1179 = vmatpush.msra.mxu0 %v578
        %1180 = vmatmul.f32.gmra.mxu0 %v248
        %v1181 = vpop.f32.mrf.mxu0
        %v1182 = vadd.f32 %v1159, %v1181
        %1183 = vmatmul.f32.gmra.mxu0 %v256
        %v1184 = vpop.f32.mrf.mxu0
        %v1185 = vadd.f32 %v1162, %v1184
        %1186 = vdwg.mxu0
        %1187 = vmatpush.msra.mxu0 %v640
        %1188 = vmatpush.msra.mxu0 %v638
        %1189 = vmatpush.msra.mxu0 %v636
        %1190 = vmatpush.msra.mxu0 %v634
        %1191 = vmatpush.msra.mxu0 %v632
        %1192 = vmatpush.msra.mxu0 %v630
        %1193 = vmatpush.msra.mxu0 %v628
        %1194 = vmatpush.msra.mxu0 %v626
        %1195 = vmatpush.msra.mxu0 %v624
        %1196 = vmatpush.msra.mxu0 %v622
        %1197 = vmatpush.msra.mxu0 %v620
        %1198 = vmatpush.msra.mxu0 %v618
        %1199 = vmatpush.msra.mxu0 %v616
        %1200 = vmatpush.msra.mxu0 %v614
        %1201 = vmatpush.msra.mxu0 %v612
        %1202 = vmatpush.msra.mxu0 %v610
        %1203 = vmatmul.f32.gmra.mxu0 %v249
        %v1204 = vpop.f32.mrf.mxu0
        %v1205 = vadd.f32 %v1182, %v1204
        %1206 = vmatmul.f32.gmra.mxu0 %v257
        %v1207 = vpop.f32.mrf.mxu0
        %v1208 = vadd.f32 %v1185, %v1207
        %1209 = vdwg.mxu0
        %1210 = vmatpush.msra.mxu0 %v417
        %1211 = vmatpush.msra.mxu0 %v415
        %1212 = vmatpush.msra.mxu0 %v413
        %1213 = vmatpush.msra.mxu0 %v411
        %1214 = vmatpush.msra.mxu0 %v409
        %1215 = vmatpush.msra.mxu0 %v407
        %1216 = vmatpush.msra.mxu0 %v405
        %1217 = vmatpush.msra.mxu0 %v403
        %1218 = vmatpush.msra.mxu0 %v401
        %1219 = vmatpush.msra.mxu0 %v399
        %1220 = vmatpush.msra.mxu0 %v397
        %1221 = vmatpush.msra.mxu0 %v395
        %1222 = vmatpush.msra.mxu0 %v393
        %1223 = vmatpush.msra.mxu0 %v391
        %1224 = vmatpush.msra.mxu0 %v389
        %1225 = vmatpush.msra.mxu0 %v387
        %1226 = vmatmul.f32.gmra.mxu0 %v242
        %v1227 = vpop.f32.mrf.mxu0
        %v1228 = vadd.f32 0.0, %v1227
        %1229 = vmatmul.f32.gmra.mxu0 %v250
        %v1230 = vpop.f32.mrf.mxu0
        %v1231 = vadd.f32 0.0, %v1230
        %1232 = vdwg.mxu0
        %1233 = vmatpush.msra.mxu0 %v449
        %1234 = vmatpush.msra.mxu0 %v447
        %1235 = vmatpush.msra.mxu0 %v445
        %1236 = vmatpush.msra.mxu0 %v443
        %1237 = vmatpush.msra.mxu0 %v441
        %1238 = vmatpush.msra.mxu0 %v439
        %1239 = vmatpush.msra.mxu0 %v437
        %1240 = vmatpush.msra.mxu0 %v435
        %1241 = vmatpush.msra.mxu0 %v433
        %1242 = vmatpush.msra.mxu0 %v431
        %1243 = vmatpush.msra.mxu0 %v429
        %1244 = vmatpush.msra.mxu0 %v427
        %1245 = vmatpush.msra.mxu0 %v425
        %1246 = vmatpush.msra.mxu0 %v423
        %1247 = vmatpush.msra.mxu0 %v421
        %1248 = vmatpush.msra.mxu0 %v419
        %1249 = vmatmul.f32.gmra.mxu0 %v243
        %v1250 = vpop.f32.mrf.mxu0
        %v1251 = vadd.f32 %v1228, %v1250
        %1252 = vmatmul.f32.gmra.mxu0 %v251
        %v1253 = vpop.f32.mrf.mxu0
        %v1254 = vadd.f32 %v1231, %v1253
        %1255 = vdwg.mxu0
        %1256 = vmatpush.msra.mxu0 %v481
        %1257 = vmatpush.msra.mxu0 %v479
        %1258 = vmatpush.msra.mxu0 %v477
        %1259 = vmatpush.msra.mxu0 %v475
        %1260 = vmatpush.msra.mxu0 %v473
        %1261 = vmatpush.msra.mxu0 %v471
        %1262 = vmatpush.msra.mxu0 %v469
        %1263 = vmatpush.msra.mxu0 %v467
        %1264 = vmatpush.msra.mxu0 %v465
        %1265 = vmatpush.msra.mxu0 %v463
        %1266 = vmatpush.msra.mxu0 %v461
        %1267 = vmatpush.msra.mxu0 %v459
        %1268 = vmatpush.msra.mxu0 %v457
        %1269 = vmatpush.msra.mxu0 %v455
        %1270 = vmatpush.msra.mxu0 %v453
        %1271 = vmatpush.msra.mxu0 %v451
        %1272 = vmatmul.f32.gmra.mxu0 %v244
        %v1273 = vpop.f32.mrf.mxu0
        %v1274 = vadd.f32 %v1251, %v1273
        %1275 = vmatmul.f32.gmra.mxu0 %v252
        %v1276 = vpop.f32.mrf.mxu0
        %v1277 = vadd.f32 %v1254, %v1276
        %1278 = vdwg.mxu0
        %1279 = vmatpush.msra.mxu0 %v513
        %1280 = vmatpush.msra.mxu0 %v511
        %1281 = vmatpush.msra.mxu0 %v509
        %1282 = vmatpush.msra.mxu0 %v507
        %1283 = vmatpush.msra.mxu0 %v505
        %1284 = vmatpush.msra.mxu0 %v503
        %1285 = vmatpush.msra.mxu0 %v501
        %1286 = vmatpush.msra.mxu0 %v499
        %1287 = vmatpush.msra.mxu0 %v497
        %1288 = vmatpush.msra.mxu0 %v495
        %1289 = vmatpush.msra.mxu0 %v493
        %1290 = vmatpush.msra.mxu0 %v491
        %1291 = vmatpush.msra.mxu0 %v489
        %1292 = vmatpush.msra.mxu0 %v487
        %1293 = vmatpush.msra.mxu0 %v485
        %1294 = vmatpush.msra.mxu0 %v483
        %1295 = vmatmul.f32.gmra.mxu0 %v245
        %v1296 = vpop.f32.mrf.mxu0
        %v1297 = vadd.f32 %v1274, %v1296
        %1298 = vmatmul.f32.gmra.mxu0 %v253
        %v1299 = vpop.f32.mrf.mxu0
        %v1300 = vadd.f32 %v1277, %v1299
        %1301 = vdwg.mxu0
        %1302 = vmatpush.msra.mxu0 %v545
        %1303 = vmatpush.msra.mxu0 %v543
        %1304 = vmatpush.msra.mxu0 %v541
        %1305 = vmatpush.msra.mxu0 %v539
        %1306 = vmatpush.msra.mxu0 %v537
        %1307 = vmatpush.msra.mxu0 %v535
        %1308 = vmatpush.msra.mxu0 %v533
        %1309 = vmatpush.msra.mxu0 %v531
        %1310 = vmatpush.msra.mxu0 %v529
        %1311 = vmatpush.msra.mxu0 %v527
        %1312 = vmatpush.msra.mxu0 %v525
        %1313 = vmatpush.msra.mxu0 %v523
        %1314 = vmatpush.msra.mxu0 %v521
        %1315 = vmatpush.msra.mxu0 %v519
        %1316 = vmatpush.msra.mxu0 %v517
        %1317 = vmatpush.msra.mxu0 %v515
        %1318 = vmatmul.f32.gmra.mxu0 %v246
        %v1319 = vpop.f32.mrf.mxu0
        %v1320 = vadd.f32 %v1297, %v1319
        %1321 = vmatmul.f32.gmra.mxu0 %v254
        %v1322 = vpop.f32.mrf.mxu0
        %v1323 = vadd.f32 %v1300, %v1322
        %1324 = vdwg.mxu0
        %1325 = vmatpush.msra.mxu0 %v577
        %1326 = vmatpush.msra.mxu0 %v575
        %1327 = vmatpush.msra.mxu0 %v573
        %1328 = vmatpush.msra.mxu0 %v571
        %1329 = vmatpush.msra.mxu0 %v569
        %1330 = vmatpush.msra.mxu0 %v567
        %1331 = vmatpush.msra.mxu0 %v565
        %1332 = vmatpush.msra.mxu0 %v563
        %1333 = vmatpush.msra.mxu0 %v561
        %1334 = vmatpush.msra.mxu0 %v559
        %1335 = vmatpush.msra.mxu0 %v557
        %1336 = vmatpush.msra.mxu0 %v555
        %1337 = vmatpush.msra.mxu0 %v553
        %1338 = vmatpush.msra.mxu0 %v551
        %1339 = vmatpush.msra.mxu0 %v549
        %1340 = vmatpush.msra.mxu0 %v547
        %1341 = vmatmul.f32.gmra.mxu0 %v247
        %v1342 = vpop.f32.mrf.mxu0
        %v1343 = vadd.f32 %v1320, %v1342
        %1344 = vmatmul.f32.gmra.mxu0 %v255
        %v1345 = vpop.f32.mrf.mxu0
        %v1346 = vadd.f32 %v1323, %v1345
        %1347 = vdwg.mxu0
        %1348 = vmatpush.msra.mxu0 %v609
        %1349 = vmatpush.msra.mxu0 %v607
        %1350 = vmatpush.msra.mxu0 %v605
        %1351 = vmatpush.msra.mxu0 %v603
        %1352 = vmatpush.msra.mxu0 %v601
        %1353 = vmatpush.msra.mxu0 %v599
        %1354 = vmatpush.msra.mxu0 %v597
        %1355 = vmatpush.msra.mxu0 %v595
        %1356 = vmatpush.msra.mxu0 %v593
        %1357 = vmatpush.msra.mxu0 %v591
        %1358 = vmatpush.msra.mxu0 %v589
        %1359 = vmatpush.msra.mxu0 %v587
        %1360 = vmatpush.msra.mxu0 %v585
        %1361 = vmatpush.msra.mxu0 %v583
        %1362 = vmatpush.msra.mxu0 %v581
        %1363 = vmatpush.msra.mxu0 %v579
        %1364 = vmatmul.f32.gmra.mxu0 %v248
        %v1365 = vpop.f32.mrf.mxu0
        %v1366 = vadd.f32 %v1343, %v1365
        %1367 = vmatmul.f32.gmra.mxu0 %v256
        %v1368 = vpop.f32.mrf.mxu0
        %v1369 = vadd.f32 %v1346, %v1368
        %1370 = vdwg.mxu0
        %1371 = vmatpush.msra.mxu0 %v641
        %1372 = vmatpush.msra.mxu0 %v639
        %1373 = vmatpush.msra.mxu0 %v637
        %1374 = vmatpush.msra.mxu0 %v635
        %1375 = vmatpush.msra.mxu0 %v633
        %1376 = vmatpush.msra.mxu0 %v631
        %1377 = vmatpush.msra.mxu0 %v629
        %1378 = vmatpush.msra.mxu0 %v627
        %1379 = vmatpush.msra.mxu0 %v625
        %1380 = vmatpush.msra.mxu0 %v623
        %1381 = vmatpush.msra.mxu0 %v621
        %1382 = vmatpush.msra.mxu0 %v619
        %1383 = vmatpush.msra.mxu0 %v617
        %1384 = vmatpush.msra.mxu0 %v615
        %1385 = vmatpush.msra.mxu0 %v613
        %1386 = vmatpush.msra.mxu0 %v611
        %1387 = vmatmul.f32.gmra.mxu0 %v249
        %v1388 = vpop.f32.mrf.mxu0
        %v1389 = vadd.f32 %v1366, %v1388
        %1390 = vmatmul.f32.gmra.mxu0 %v257
        %v1391 = vpop.f32.mrf.mxu0
        %v1392 = vadd.f32 %v1369, %v1391
        %1393 = vdwg.mxu0
        %1394 = vmatpush.msra.mxu0 %v800
        %1395 = vmatpush.msra.mxu0 %v798
        %1396 = vmatpush.msra.mxu0 %v796
        %1397 = vmatpush.msra.mxu0 %v794
        %1398 = vmatpush.msra.mxu0 %v792
        %1399 = vmatpush.msra.mxu0 %v790
        %1400 = vmatpush.msra.mxu0 %v788
        %1401 = vmatpush.msra.mxu0 %v786
        %1402 = vmatpush.msra.mxu0 %v784
        %1403 = vmatpush.msra.mxu0 %v782
        %1404 = vmatpush.msra.mxu0 %v780
        %1405 = vmatpush.msra.mxu0 %v778
        %1406 = vmatpush.msra.mxu0 %v776
        %1407 = vmatpush.msra.mxu0 %v774
        %1408 = vmatpush.msra.mxu0 %v772
        %1409 = vmatpush.msra.mxu0 %v770
        %1410 = vmatmul.f32.gmra.mxu0 %v242
        %v1411 = vpop.f32.mrf.mxu0
        %v1412 = vadd.f32 0.0, %v1411
        %1413 = vmatmul.f32.gmra.mxu0 %v250
        %v1414 = vpop.f32.mrf.mxu0
        %v1415 = vadd.f32 0.0, %v1414
        %1416 = vdwg.mxu0
        %1417 = vmatpush.msra.mxu0 %v832
        %1418 = vmatpush.msra.mxu0 %v830
        %1419 = vmatpush.msra.mxu0 %v828
        %1420 = vmatpush.msra.mxu0 %v826
        %1421 = vmatpush.msra.mxu0 %v824
        %1422 = vmatpush.msra.mxu0 %v822
        %1423 = vmatpush.msra.mxu0 %v820
        %1424 = vmatpush.msra.mxu0 %v818
        %1425 = vmatpush.msra.mxu0 %v816
        %1426 = vmatpush.msra.mxu0 %v814
        %1427 = vmatpush.msra.mxu0 %v812
        %1428 = vmatpush.msra.mxu0 %v810
        %1429 = vmatpush.msra.mxu0 %v808
        %1430 = vmatpush.msra.mxu0 %v806
        %1431 = vmatpush.msra.mxu0 %v804
        %1432 = vmatpush.msra.mxu0 %v802
        %1433 = vmatmul.f32.gmra.mxu0 %v243
        %v1434 = vpop.f32.mrf.mxu0
        %v1435 = vadd.f32 %v1412, %v1434
        %1436 = vmatmul.f32.gmra.mxu0 %v251
        %v1437 = vpop.f32.mrf.mxu0
        %v1438 = vadd.f32 %v1415, %v1437
        %1439 = vdwg.mxu0
        %1440 = vmatpush.msra.mxu0 %v864
        %1441 = vmatpush.msra.mxu0 %v862
        %1442 = vmatpush.msra.mxu0 %v860
        %1443 = vmatpush.msra.mxu0 %v858
        %1444 = vmatpush.msra.mxu0 %v856
        %1445 = vmatpush.msra.mxu0 %v854
        %1446 = vmatpush.msra.mxu0 %v852
        %1447 = vmatpush.msra.mxu0 %v850
        %1448 = vmatpush.msra.mxu0 %v848
        %1449 = vmatpush.msra.mxu0 %v846
        %1450 = vmatpush.msra.mxu0 %v844
        %1451 = vmatpush.msra.mxu0 %v842
        %1452 = vmatpush.msra.mxu0 %v840
        %1453 = vmatpush.msra.mxu0 %v838
        %1454 = vmatpush.msra.mxu0 %v836
        %1455 = vmatpush.msra.mxu0 %v834
        %1456 = vmatmul.f32.gmra.mxu0 %v244
        %v1457 = vpop.f32.mrf.mxu0
        %v1458 = vadd.f32 %v1435, %v1457
        %1459 = vmatmul.f32.gmra.mxu0 %v252
        %v1460 = vpop.f32.mrf.mxu0
        %v1461 = vadd.f32 %v1438, %v1460
        %1462 = vdwg.mxu0
        %1463 = vmatpush.msra.mxu0 %v896
        %1464 = vmatpush.msra.mxu0 %v894
        %1465 = vmatpush.msra.mxu0 %v892
        %1466 = vmatpush.msra.mxu0 %v890
        %1467 = vmatpush.msra.mxu0 %v888
        %1468 = vmatpush.msra.mxu0 %v886
        %1469 = vmatpush.msra.mxu0 %v884
        %1470 = vmatpush.msra.mxu0 %v882
        %1471 = vmatpush.msra.mxu0 %v880
        %1472 = vmatpush.msra.mxu0 %v878
        %1473 = vmatpush.msra.mxu0 %v876
        %1474 = vmatpush.msra.mxu0 %v874
        %1475 = vmatpush.msra.mxu0 %v872
        %1476 = vmatpush.msra.mxu0 %v870
        %1477 = vmatpush.msra.mxu0 %v868
        %1478 = vmatpush.msra.mxu0 %v866
        %1479 = vmatmul.f32.gmra.mxu0 %v245
        %v1480 = vpop.f32.mrf.mxu0
        %v1481 = vadd.f32 %v1458, %v1480
        %1482 = vmatmul.f32.gmra.mxu0 %v253
        %v1483 = vpop.f32.mrf.mxu0
        %v1484 = vadd.f32 %v1461, %v1483
        %1485 = vdwg.mxu0
        %1486 = vmatpush.msra.mxu0 %v928
        %1487 = vmatpush.msra.mxu0 %v926
        %1488 = vmatpush.msra.mxu0 %v924
        %1489 = vmatpush.msra.mxu0 %v922
        %1490 = vmatpush.msra.mxu0 %v920
        %1491 = vmatpush.msra.mxu0 %v918
        %1492 = vmatpush.msra.mxu0 %v916
        %1493 = vmatpush.msra.mxu0 %v914
        %1494 = vmatpush.msra.mxu0 %v912
        %1495 = vmatpush.msra.mxu0 %v910
        %1496 = vmatpush.msra.mxu0 %v908
        %1497 = vmatpush.msra.mxu0 %v906
        %1498 = vmatpush.msra.mxu0 %v904
        %1499 = vmatpush.msra.mxu0 %v902
        %1500 = vmatpush.msra.mxu0 %v900
        %1501 = vmatpush.msra.mxu0 %v898
        %1502 = vmatmul.f32.gmra.mxu0 %v246
        %v1503 = vpop.f32.mrf.mxu0
        %v1504 = vadd.f32 %v1481, %v1503
        %1505 = vmatmul.f32.gmra.mxu0 %v254
        %v1506 = vpop.f32.mrf.mxu0
        %v1507 = vadd.f32 %v1484, %v1506
        %1508 = vdwg.mxu0
        %1509 = vmatpush.msra.mxu0 %v960
        %1510 = vmatpush.msra.mxu0 %v958
        %1511 = vmatpush.msra.mxu0 %v956
        %1512 = vmatpush.msra.mxu0 %v954
        %1513 = vmatpush.msra.mxu0 %v952
        %1514 = vmatpush.msra.mxu0 %v950
        %1515 = vmatpush.msra.mxu0 %v948
        %1516 = vmatpush.msra.mxu0 %v946
        %1517 = vmatpush.msra.mxu0 %v944
        %1518 = vmatpush.msra.mxu0 %v942
        %1519 = vmatpush.msra.mxu0 %v940
        %1520 = vmatpush.msra.mxu0 %v938
        %1521 = vmatpush.msra.mxu0 %v936
        %1522 = vmatpush.msra.mxu0 %v934
        %1523 = vmatpush.msra.mxu0 %v932
        %1524 = vmatpush.msra.mxu0 %v930
        %1525 = vmatmul.f32.gmra.mxu0 %v247
        %v1526 = vpop.f32.mrf.mxu0
        %v1527 = vadd.f32 %v1504, %v1526
        %1528 = vmatmul.f32.gmra.mxu0 %v255
        %v1529 = vpop.f32.mrf.mxu0
        %v1530 = vadd.f32 %v1507, %v1529
        %1531 = vdwg.mxu0
        %1532 = vmatpush.msra.mxu0 %v992
        %1533 = vmatpush.msra.mxu0 %v990
        %1534 = vmatpush.msra.mxu0 %v988
        %1535 = vmatpush.msra.mxu0 %v986
        %1536 = vmatpush.msra.mxu0 %v984
        %1537 = vmatpush.msra.mxu0 %v982
        %1538 = vmatpush.msra.mxu0 %v980
        %1539 = vmatpush.msra.mxu0 %v978
        %1540 = vmatpush.msra.mxu0 %v976
        %1541 = vmatpush.msra.mxu0 %v974
        %1542 = vmatpush.msra.mxu0 %v972
        %1543 = vmatpush.msra.mxu0 %v970
        %1544 = vmatpush.msra.mxu0 %v968
        %1545 = vmatpush.msra.mxu0 %v966
        %1546 = vmatpush.msra.mxu0 %v964
        %1547 = vmatpush.msra.mxu0 %v962
        %1548 = vmatmul.f32.gmra.mxu0 %v248
        %v1549 = vpop.f32.mrf.mxu0
        %v1550 = vadd.f32 %v1527, %v1549
        %1551 = vmatmul.f32.gmra.mxu0 %v256
        %v1552 = vpop.f32.mrf.mxu0
        %v1553 = vadd.f32 %v1530, %v1552
        %1554 = vdwg.mxu0
        %1555 = vmatpush.msra.mxu0 %v1024
        %1556 = vmatpush.msra.mxu0 %v1022
        %1557 = vmatpush.msra.mxu0 %v1020
        %1558 = vmatpush.msra.mxu0 %v1018
        %1559 = vmatpush.msra.mxu0 %v1016
        %1560 = vmatpush.msra.mxu0 %v1014
        %1561 = vmatpush.msra.mxu0 %v1012
        %1562 = vmatpush.msra.mxu0 %v1010
        %1563 = vmatpush.msra.mxu0 %v1008
        %1564 = vmatpush.msra.mxu0 %v1006
        %1565 = vmatpush.msra.mxu0 %v1004
        %1566 = vmatpush.msra.mxu0 %v1002
        %1567 = vmatpush.msra.mxu0 %v1000
        %1568 = vmatpush.msra.mxu0 %v998
        %1569 = vmatpush.msra.mxu0 %v996
        %1570 = vmatpush.msra.mxu0 %v994
        %1571 = vmatmul.f32.gmra.mxu0 %v249
        %v1572 = vpop.f32.mrf.mxu0
        %v1573 = vadd.f32 %v1550, %v1572
        %1574 = vmatmul.f32.gmra.mxu0 %v257
        %v1575 = vpop.f32.mrf.mxu0
        %v1576 = vadd.f32 %v1553, %v1575
        %1577 = vdwg.mxu0
        %1578 = vmatpush.msra.mxu0 %v801
        %1579 = vmatpush.msra.mxu0 %v799
        %1580 = vmatpush.msra.mxu0 %v797
        %1581 = vmatpush.msra.mxu0 %v795
        %1582 = vmatpush.msra.mxu0 %v793
        %1583 = vmatpush.msra.mxu0 %v791
        %1584 = vmatpush.msra.mxu0 %v789
        %1585 = vmatpush.msra.mxu0 %v787
        %1586 = vmatpush.msra.mxu0 %v785
        %1587 = vmatpush.msra.mxu0 %v783
        %1588 = vmatpush.msra.mxu0 %v781
        %1589 = vmatpush.msra.mxu0 %v779
        %1590 = vmatpush.msra.mxu0 %v777
        %1591 = vmatpush.msra.mxu0 %v775
        %1592 = vmatpush.msra.mxu0 %v773
        %1593 = vmatpush.msra.mxu0 %v771
        %1594 = vmatmul.f32.gmra.mxu0 %v242
        %v1595 = vpop.f32.mrf.mxu0
        %v1596 = vadd.f32 0.0, %v1595
        %1597 = vmatmul.f32.gmra.mxu0 %v250
        %v1598 = vpop.f32.mrf.mxu0
        %v1599 = vadd.f32 0.0, %v1598
        %1600 = vdwg.mxu0
        %1601 = vmatpush.msra.mxu0 %v833
        %1602 = vmatpush.msra.mxu0 %v831
        %1603 = vmatpush.msra.mxu0 %v829
        %1604 = vmatpush.msra.mxu0 %v827
        %1605 = vmatpush.msra.mxu0 %v825
        %1606 = vmatpush.msra.mxu0 %v823
        %1607 = vmatpush.msra.mxu0 %v821
        %1608 = vmatpush.msra.mxu0 %v819
        %1609 = vmatpush.msra.mxu0 %v817
        %1610 = vmatpush.msra.mxu0 %v815
        %1611 = vmatpush.msra.mxu0 %v813
        %1612 = vmatpush.msra.mxu0 %v811
        %1613 = vmatpush.msra.mxu0 %v809
        %1614 = vmatpush.msra.mxu0 %v807
        %1615 = vmatpush.msra.mxu0 %v805
        %1616 = vmatpush.msra.mxu0 %v803
        %1617 = vmatmul.f32.gmra.mxu0 %v243
        %v1618 = vpop.f32.mrf.mxu0
        %v1619 = vadd.f32 %v1596, %v1618
        %1620 = vmatmul.f32.gmra.mxu0 %v251
        %v1621 = vpop.f32.mrf.mxu0
        %v1622 = vadd.f32 %v1599, %v1621
        %1623 = vdwg.mxu0
        %1624 = vmatpush.msra.mxu0 %v865
        %1625 = vmatpush.msra.mxu0 %v863
        %1626 = vmatpush.msra.mxu0 %v861
        %1627 = vmatpush.msra.mxu0 %v859
        %1628 = vmatpush.msra.mxu0 %v857
        %1629 = vmatpush.msra.mxu0 %v855
        %1630 = vmatpush.msra.mxu0 %v853
        %1631 = vmatpush.msra.mxu0 %v851
        %1632 = vmatpush.msra.mxu0 %v849
        %1633 = vmatpush.msra.mxu0 %v847
        %1634 = vmatpush.msra.mxu0 %v845
        %1635 = vmatpush.msra.mxu0 %v843
        %1636 = vmatpush.msra.mxu0 %v841
        %1637 = vmatpush.msra.mxu0 %v839
        %1638 = vmatpush.msra.mxu0 %v837
        %1639 = vmatpush.msra.mxu0 %v835
        %1640 = vmatmul.f32.gmra.mxu0 %v244
        %v1641 = vpop.f32.mrf.mxu0
        %v1642 = vadd.f32 %v1619, %v1641
        %1643 = vmatmul.f32.gmra.mxu0 %v252
        %v1644 = vpop.f32.mrf.mxu0
        %v1645 = vadd.f32 %v1622, %v1644
        %1646 = vdwg.mxu0
        %1647 = vmatpush.msra.mxu0 %v897
        %1648 = vmatpush.msra.mxu0 %v895
        %1649 = vmatpush.msra.mxu0 %v893
        %1650 = vmatpush.msra.mxu0 %v891
        %1651 = vmatpush.msra.mxu0 %v889
        %1652 = vmatpush.msra.mxu0 %v887
        %1653 = vmatpush.msra.mxu0 %v885
        %1654 = vmatpush.msra.mxu0 %v883
        %1655 = vmatpush.msra.mxu0 %v881
        %1656 = vmatpush.msra.mxu0 %v879
        %1657 = vmatpush.msra.mxu0 %v877
        %1658 = vmatpush.msra.mxu0 %v875
        %1659 = vmatpush.msra.mxu0 %v873
        %1660 = vmatpush.msra.mxu0 %v871
        %1661 = vmatpush.msra.mxu0 %v869
        %1662 = vmatpush.msra.mxu0 %v867
        %1663 = vmatmul.f32.gmra.mxu0 %v245
        %v1664 = vpop.f32.mrf.mxu0
        %v1665 = vadd.f32 %v1642, %v1664
        %1666 = vmatmul.f32.gmra.mxu0 %v253
        %v1667 = vpop.f32.mrf.mxu0
        %v1668 = vadd.f32 %v1645, %v1667
        %1669 = vdwg.mxu0
        %1670 = vmatpush.msra.mxu0 %v929
        %1671 = vmatpush.msra.mxu0 %v927
        %1672 = vmatpush.msra.mxu0 %v925
        %1673 = vmatpush.msra.mxu0 %v923
        %1674 = vmatpush.msra.mxu0 %v921
        %1675 = vmatpush.msra.mxu0 %v919
        %1676 = vmatpush.msra.mxu0 %v917
        %1677 = vmatpush.msra.mxu0 %v915
        %1678 = vmatpush.msra.mxu0 %v913
        %1679 = vmatpush.msra.mxu0 %v911
        %1680 = vmatpush.msra.mxu0 %v909
        %1681 = vmatpush.msra.mxu0 %v907
        %1682 = vmatpush.msra.mxu0 %v905
        %1683 = vmatpush.msra.mxu0 %v903
        %1684 = vmatpush.msra.mxu0 %v901
        %1685 = vmatpush.msra.mxu0 %v899
        %1686 = vmatmul.f32.gmra.mxu0 %v246
        %v1687 = vpop.f32.mrf.mxu0
        %v1688 = vadd.f32 %v1665, %v1687
        %1689 = vmatmul.f32.gmra.mxu0 %v254
        %v1690 = vpop.f32.mrf.mxu0
        %v1691 = vadd.f32 %v1668, %v1690
        %1692 = vdwg.mxu0
        %1693 = vmatpush.msra.mxu0 %v961
        %1694 = vmatpush.msra.mxu0 %v959
        %1695 = vmatpush.msra.mxu0 %v957
        %1696 = vmatpush.msra.mxu0 %v955
        %1697 = vmatpush.msra.mxu0 %v953
        %1698 = vmatpush.msra.mxu0 %v951
        %1699 = vmatpush.msra.mxu0 %v949
        %1700 = vmatpush.msra.mxu0 %v947
        %1701 = vmatpush.msra.mxu0 %v945
        %1702 = vmatpush.msra.mxu0 %v943
        %1703 = vmatpush.msra.mxu0 %v941
        %1704 = vmatpush.msra.mxu0 %v939
        %1705 = vmatpush.msra.mxu0 %v937
        %1706 = vmatpush.msra.mxu0 %v935
        %1707 = vmatpush.msra.mxu0 %v933
        %1708 = vmatpush.msra.mxu0 %v931
        %1709 = vmatmul.f32.gmra.mxu0 %v247
        %v1710 = vpop.f32.mrf.mxu0
        %v1711 = vadd.f32 %v1688, %v1710
        %1712 = vmatmul.f32.gmra.mxu0 %v255
        %v1713 = vpop.f32.mrf.mxu0
        %v1714 = vadd.f32 %v1691, %v1713
        %1715 = vdwg.mxu0
        %1716 = vmatpush.msra.mxu0 %v993
        %1717 = vmatpush.msra.mxu0 %v991
        %1718 = vmatpush.msra.mxu0 %v989
        %1719 = vmatpush.msra.mxu0 %v987
        %1720 = vmatpush.msra.mxu0 %v985
        %1721 = vmatpush.msra.mxu0 %v983
        %1722 = vmatpush.msra.mxu0 %v981
        %1723 = vmatpush.msra.mxu0 %v979
        %1724 = vmatpush.msra.mxu0 %v977
        %1725 = vmatpush.msra.mxu0 %v975
        %1726 = vmatpush.msra.mxu0 %v973
        %1727 = vmatpush.msra.mxu0 %v971
        %1728 = vmatpush.msra.mxu0 %v969
        %1729 = vmatpush.msra.mxu0 %v967
        %1730 = vmatpush.msra.mxu0 %v965
        %1731 = vmatpush.msra.mxu0 %v963
        %1732 = vmatmul.f32.gmra.mxu0 %v248
        %v1733 = vpop.f32.mrf.mxu0
        %v1734 = vadd.f32 %v1711, %v1733
        %1735 = vmatmul.f32.gmra.mxu0 %v256
        %v1736 = vpop.f32.mrf.mxu0
        %v1737 = vadd.f32 %v1714, %v1736
        %1738 = vdwg.mxu0
        %1739 = vmatpush.msra.mxu0 %v1025
        %1740 = vmatpush.msra.mxu0 %v1023
        %1741 = vmatpush.msra.mxu0 %v1021
        %1742 = vmatpush.msra.mxu0 %v1019
        %1743 = vmatpush.msra.mxu0 %v1017
        %1744 = vmatpush.msra.mxu0 %v1015
        %1745 = vmatpush.msra.mxu0 %v1013
        %1746 = vmatpush.msra.mxu0 %v1011
        %1747 = vmatpush.msra.mxu0 %v1009
        %1748 = vmatpush.msra.mxu0 %v1007
        %1749 = vmatpush.msra.mxu0 %v1005
        %1750 = vmatpush.msra.mxu0 %v1003
        %1751 = vmatpush.msra.mxu0 %v1001
        %1752 = vmatpush.msra.mxu0 %v999
        %1753 = vmatpush.msra.mxu0 %v997
        %1754 = vmatpush.msra.mxu0 %v995
        %1755 = vmatmul.f32.gmra.mxu0 %v249
        %v1756 = vpop.f32.mrf.mxu0
        %v1757 = vadd.f32 %v1734, %v1756
        %1758 = vmatmul.f32.gmra.mxu0 %v257
        %v1759 = vpop.f32.mrf.mxu0
        %v1760 = vadd.f32 %v1737, %v1759
        %1761 = vdwg.mxu0
        %v1762 = vsub.f32 %v1205, %v1576
        %v1763 = vsub.f32 %v1389, %v1760
        %v1764 = vadd.f32 %v1573, %v1208
        %v1765 = vadd.f32 %v1757, %v1392
        %v1766 = vmul.f32 %v1762, %v1762
        %v1767 = vmul.f32 %v1763, %v1763
        %v1768 = vmul.f32 %v1764, %v1764
        %v1769 = vmul.f32 %v1765, %v1765
        %v1770 = vadd.f32 %v1766, %v1768
        %v1771 = vadd.f32 %v1767, %v1769
        %s1772 = smul.u32 %s18, 256
        %p1773 = scmp.lt.s32.totalorder %s1772, 512
        %s1774 = scalar_select %p1773, 1.0, -1.0
        %v1775 = vld [vmem:[%s3] sm:$0xff]
        %v1776 = vadd.f32 %v1770, %v1771
        %1777 = vadd.xlane.f32.xlu0 %v1776
        %v1778 = vpop.xlane.xlu0 %1777
        %v1779 = vstv %s1774
        %v1780 = vmul.f32 %v1779, %v1778
        %v1781 = vadd.f32 %v1775, %v1780
        %vm1782 = vcmask 7168
        %1783 = vst.msk [vmem:[%s3] sm:$0xff] %vm1782, %v1781
        // Predicated region
        $region49: #{tpu_custom_call.1} parent=31 // pred_check
          %p1784 = pneg %p104
        $region50: #{tpu_custom_call.1} parent=31 // pred_check_branch
          %1786 = sbr.rel (%p1784) target = $region52
        $region51: #{tpu_custom_call.1} parent=31 // pred_region
          _
        $region52: #{tpu_custom_call.1} parent=31 // pred_fallthru
          _
        // Predicated region
        $region53: #{tpu_custom_call.1} parent=31 // pred_check
          %p1787 = pneg %p104
        $region54: #{tpu_custom_call.1} parent=31 // pred_check_branch
          %1789 = sbr.rel (%p1787) target = $region56
        $region55: #{tpu_custom_call.1} parent=31 // pred_region
          _
        $region56: #{tpu_custom_call.1} parent=31 // pred_fallthru
          _
      $region32: #{tpu_custom_call.1} parent=5 // pred_fallthru
        _
      %p1790 = scmp.le.s32.totalorder 2, %s13
      // Predicated region
      $region57: #{tpu_custom_call.1} parent=5 // pred_check
        %p1791 = pneg %p1790
      $region58: #{tpu_custom_call.1} parent=5 // pred_check_branch
        %1793 = sbr.rel (%p1791) target = $region60
      $region59: #{tpu_custom_call.1} parent=5 // pred_region
        %s1794 = ssub.s32 %s13, 2
      $region60: #{tpu_custom_call.1} parent=5 // pred_fallthru
        _
    $region6: #{tpu_custom_call.1} parent=1 // loop_footer
      %s17 = sadd.s32 1, %s13
    $region7: #{tpu_custom_call.1} parent=1 // loop_footer_branch
      %12 = sbr.rel target = $region3
    $region8: #{tpu_custom_call.1} parent=1 // loop_exit
      _
    %1795 = vsyncpa [#allocation3], 1
    %s1796 = scalar_lea.sflag [#allocation3], 1
    %1797 = vsyncpa %s1796, 1
    %1798 = vsyncpa [#allocation5], 1
    %s1799 = scalar_lea.sflag [#allocation5], 1
    %1800 = vsyncpa %s1799, 1

</llo_original>
